<compile_context>
chip_gen: v6e
topology: v6e:2x2x1
jax: 0.10.0
libtpu: 0.0.40
codegen_flags: <defaults>
</compile_context>

<pallas_src>
import functools
import math

import jax
import jax.numpy as jnp
from jax.experimental import pallas as pl
from jax.experimental.pallas import tpu as pltpu

EPS = 1e-5          # RoBERTa layer_norm_eps
NEG = -1e30         # finite masked-score value (avoids NaN even for masked rows)
CLS_PAD = 128       # classifier logits padded to a lane-dense width


def _layer_norm(x, g, b):
    mu = jnp.mean(x, axis=-1, keepdims=True)
    var = jnp.mean((x - mu) ** 2, axis=-1, keepdims=True)
    return (x - mu) * jax.lax.rsqrt(var + EPS) * g + b


def _gelu(x):
    # TODO(synk): RoBERTa uses exact erf-GELU; tanh approximation used for TPU lowering.
    return 0.5 * x * (1.0 + jnp.tanh(0.7978845608028654 * (x + 0.044715 * x * x * x)))


# ---------------------------------------------------------------------------
# Fused forward kernel: grid = (num_layers,), activation resident in VMEM scratch.
# ---------------------------------------------------------------------------
def _fused_forward_kernel(num_heads, head_dim, num_layers, batch, seq,
                          emb_ref, segq_ref, segk_ref, eg_ref, eb_ref,
                          wqkv_ref, bqkv_ref, wo_ref, bo_ref, ln1g_ref, ln1b_ref,
                          w1_ref, b1_ref, w2_ref, b2_ref, ln2g_ref, ln2b_ref,
                          wc_ref, bc_ref, oh_ref,
                          logits_ref, loss_ref,
                          x_scr, ctx_scr):
    l = pl.program_id(0)
    H = num_heads * head_dim

    # First grid step: embedding LayerNorm into the resident activation.
    @pl.when(l == 0)
    def _():
        x_scr[...] = _layer_norm(emb_ref[...], eg_ref[...], eb_ref[...])

    x = x_scr[...]                          # (B*S, H) f32, persists across layers
    xb = x.astype(jnp.bfloat16)

    # Block-diagonal + key-padding mask rebuilt in-kernel from O(B*S) segment ids
    # (padded keys carry segment -1 so they never match any query row).
    mask_ok = segq_ref[...] == segk_ref[...]      # (B*S, 1) == (1, B*S) -> (B*S, B*S)

    # ---- self attention: fused QKV projection (one deep MXU pass) ----
    qkv = jnp.dot(xb, wqkv_ref[0], preferred_element_type=jnp.float32) + bqkv_ref[0]
    qkv_b = qkv.astype(jnp.bfloat16)              # cast once, sliced per head below

    # 1/sqrt(head_dim) is folded into W_q/b_q at init; no score scaling here.
    # NOTE: static unroll is fine at 4 heads; at production head counts use a
    # heads-batched einsum or lax.fori_loop(unroll=True) to bound live ranges.
    for h in range(num_heads):
        q0 = h * head_dim
        qh = qkv_b[:, q0:q0 + head_dim]
        kh = qkv_b[:, H + q0:H + q0 + head_dim]
        vh = qkv_b[:, 2 * H + q0:2 * H + q0 + head_dim]
        # q @ k^T over the whole (B*S) batch; cross-batch / padded pairs are masked.
        s = jax.lax.dot_general(qh, kh, (((1,), (1,)), ((), ())),
                                preferred_element_type=jnp.float32)
        s = jnp.where(mask_ok, s, NEG)
        s = s - jnp.max(s, axis=-1, keepdims=True)
        p = jnp.exp(s)
        p = p * pl.reciprocal(jnp.sum(p, axis=-1, keepdims=True), approx=True)
        ctx = jnp.dot(p.astype(jnp.bfloat16), vh, preferred_element_type=jnp.float32)
        ctx_scr[:, q0:q0 + head_dim] = ctx        # assemble heads in VMEM scratch

    # Single deep K=H output projection instead of num_heads K=head_dim matmuls.
    attn = jnp.dot(ctx_scr[...].astype(jnp.bfloat16), wo_ref[0],
                   preferred_element_type=jnp.float32) + bo_ref[0]

    h1 = _layer_norm(x + attn, ln1g_ref[0], ln1b_ref[0])

    # ---- feed-forward ----
    ff = _gelu(jnp.dot(h1.astype(jnp.bfloat16), w1_ref[0],
                       preferred_element_type=jnp.float32) + b1_ref[0])
    ffo = jnp.dot(ff.astype(jnp.bfloat16), w2_ref[0],
                  preferred_element_type=jnp.float32) + b2_ref[0]
    x_new = _layer_norm(h1 + ffo, ln2g_ref[0], ln2b_ref[0])
    x_scr[...] = x_new

    # Last grid step: CLS classifier + cross-entropy epilogue.
    @pl.when(l == num_layers - 1)
    def _():
        # CLS tokens sit at a fixed stride S -> strided read, no gather matmul.
        cls = x_scr[pl.ds(0, batch, stride=seq), :]                              # (B, H)
        logits = jnp.dot(cls.astype(jnp.bfloat16), wc_ref[...],
                         preferred_element_type=jnp.float32) + bc_ref[...]       # (B, 128)
        logits_ref[...] = logits
        m = jnp.max(logits, axis=-1, keepdims=True)
        lse = jnp.log(jnp.sum(jnp.exp(logits - m), axis=-1, keepdims=True)) + m
        nll = -jnp.sum(oh_ref[...] * (logits - lse), axis=-1, keepdims=True)     # (B, 1)
        loss_ref[...] = jnp.sum(nll, axis=0, keepdims=True) * (1.0 / nll.shape[0])


# ---------------------------------------------------------------------------
# Parameter init (f32 masters; stacked per-layer weights; fused QKV with the
# attention scale folded into W_q).
# ---------------------------------------------------------------------------
def init_params(key, vocab, max_pos, H, nlayers, inter, ncls, num_heads):
    ks = jax.random.split(key, 10)
    f32 = jnp.float32

    def w(k, shape):
        return (0.02 * jax.random.normal(k, shape)).astype(f32)

    scale = 1.0 / math.sqrt(H // num_heads)
    wq = w(ks[4], (nlayers, H, H)) * scale          # fold 1/sqrt(head_dim) into W_q
    wk = w(ks[5], (nlayers, H, H))
    wv = w(ks[6], (nlayers, H, H))
    return {
        "word_emb": w(ks[0], (vocab, H)),
        "pos_emb": w(ks[1], (max_pos, H)),
        "type_emb": w(ks[2], (1, H)),
        "emb_ln_g": jnp.ones((1, H), f32),
        "emb_ln_b": jnp.zeros((1, H), f32),
        "wc": w(ks[3], (H, ncls)),                  # classifier weight [H, 3]
        "bc": jnp.zeros((1, ncls), f32),
        # stacked per-layer weights [L, ...]; weights stored [in, out], f32 masters
        "wqkv": jnp.concatenate([wq, wk, wv], axis=-1),       # (L, H, 3H)
        "bqkv": jnp.zeros((nlayers, 1, 3 * H), f32),
        "wo": w(ks[7], (nlayers, H, H)), "bo": jnp.zeros((nlayers, 1, H), f32),
        "ln1_g": jnp.ones((nlayers, 1, H), f32), "ln1_b": jnp.zeros((nlayers, 1, H), f32),
        "w1": w(ks[8], (nlayers, H, inter)), "b1": jnp.zeros((nlayers, 1, inter), f32),
        "w2": w(ks[9], (nlayers, inter, H)), "b2": jnp.zeros((nlayers, 1, H), f32),
        "ln2_g": jnp.ones((nlayers, 1, H), f32), "ln2_b": jnp.zeros((nlayers, 1, H), f32),
    }


# ---------------------------------------------------------------------------
# Full forward: embedding gathers / segment-id prep in plain JAX, everything
# else in one fused pallas_call.
# ---------------------------------------------------------------------------
def lmfolio_forward(params, input_ids, attention_mask, labels, num_heads):
    B, S = input_ids.shape
    H = params["word_emb"].shape[1]
    L = params["wqkv"].shape[0]
    ncls = params["wc"].shape[1]
    BS = B * S
    pad_id = 1
    bf = jnp.bfloat16

    # Embedding lookups (data-dependent gathers stay in plain JAX).
    # RoBERTa position ids: cumsum over non-pad tokens, offset by pad_id.
    im = (input_ids != pad_id).astype(jnp.int32)
    pos_ids = jnp.cumsum(im, axis=1) * im + pad_id
    emb = (jnp.take(params["word_emb"], input_ids, axis=0)
           + jnp.take(params["pos_emb"], pos_ids, axis=0)
           + params["type_emb"][0][None, None, :])
    emb2d = emb.reshape(BS, H).astype(jnp.float32)

    # O(B*S) segment ids; padded keys get segment -1 so they never match a query.
    seg = (jnp.arange(BS) // S).astype(jnp.float32)
    key_ok = attention_mask.reshape(BS).astype(jnp.float32)
    seg_q = seg.reshape(BS, 1)
    seg_k = jnp.where(key_ok > 0.5, seg, -1.0).reshape(1, BS)

    # Lane-dense padded classifier; padded classes get a -1e30 bias (CE unaffected).
    wc_pad = jnp.zeros((H, CLS_PAD), bf).at[:, :ncls].set(params["wc"].astype(bf))
    bc_pad = jnp.full((1, CLS_PAD), NEG, jnp.float32).at[:, :ncls].set(params["bc"])
    onehot = jax.nn.one_hot(labels, CLS_PAD, dtype=jnp.float32)

    resident = [emb2d, seg_q, seg_k, params["emb_ln_g"], params["emb_ln_b"]]
    stacked = [params["wqkv"].astype(bf), params["bqkv"],
               params["wo"].astype(bf), params["bo"],
               params["ln1_g"], params["ln1_b"],
               params["w1"].astype(bf), params["b1"],
               params["w2"].astype(bf), params["b2"],
               params["ln2_g"], params["ln2_b"]]
    tail = [wc_pad, bc_pad, onehot]

    def res_spec(a):   # fetched once, resident across all layer steps -> single buffer
        return pl.BlockSpec(a.shape, lambda l, n=a.ndim: (0,) * n,
                            pipeline_mode=pl.Buffered(1))

    def layer_spec(a):  # per-layer slab, streamed (double-buffered) along the grid
        return pl.BlockSpec((1,) + a.shape[1:], lambda l: (l, 0, 0))

    # Explicit scoped-VMEM budget: single-buffered residents + 2x per-layer slab
    # + resident activation / ctx scratch + score working set, with 2x headroom.
    def nb(a):
        return int(a.size) * a.dtype.itemsize
    est = (sum(nb(a) for a in resident + tail)
           + 2 * sum(nb(a) // a.shape[0] for a in stacked)
           + 2 * BS * H * 4                       # x_scr + ctx_scr
           + 4 * BS * BS * 4 + 4 * BS * 3 * H * 4  # per-head scores / fused qkv
           + 2 * (B * CLS_PAD * 4 + 4))
    vmem_limit = int(min(max(2 * est, 16 << 20), 64 << 20))   # cap at v7x's 64 MiB

    kernel = functools.partial(_fused_forward_kernel, num_heads, H // num_heads, L, B, S)
    logits_pad, loss = pl.pallas_call(
        kernel,
        out_shape=(jax.ShapeDtypeStruct((B, CLS_PAD), jnp.float32),
                   jax.ShapeDtypeStruct((1, 1), jnp.float32)),
        grid=(L,),
        in_specs=([res_spec(a) for a in resident]
                  + [layer_spec(a) for a in stacked]
                  + [res_spec(a) for a in tail]),
        out_specs=(pl.BlockSpec((B, CLS_PAD), lambda l: (0, 0)),
                   pl.BlockSpec((1, 1), lambda l: (0, 0))),
        scratch_shapes=[pltpu.VMEM((BS, H), jnp.float32),   # resident activation
                        pltpu.VMEM((BS, H), jnp.float32)],  # per-head context assembly
        # TODO(synk): at production sizes, flash-tile the scores and add a
        # "parallel" query-tile grid axis so v7x's two TensorCores share work.
        compiler_params=pltpu.CompilerParams(
            dimension_semantics=("arbitrary",), vmem_limit_bytes=vmem_limit),
    )(*(resident + stacked + tail))

    return dict(loss=loss[0, 0], logits=logits_pad[:, :ncls])


if __name__ == "__main__":
    B, S, H = 2, 8, 32
    num_heads, inter, nlayers = 4, 64, 2
    vocab, max_pos, ncls = 50, 16, 3

    key = jax.random.PRNGKey(0)
    pkey, ikey = jax.random.split(key)
    params = init_params(pkey, vocab, max_pos, H, nlayers, inter, ncls, num_heads)

    input_ids = jax.random.randint(ikey, (B, S), 3, vocab, dtype=jnp.int32)
    attention_mask = jnp.ones((B, S), jnp.float32).at[1, S - 1].set(0.0)
    labels = jnp.array([0, 2], dtype=jnp.int32)

    out = lmfolio_forward(params, input_ids, attention_mask, labels, num_heads)
    out = jax.block_until_ready(out)

    assert out["logits"].shape == (B, ncls)
    assert bool(jnp.isfinite(out["loss"]))
    print("KERNEL_OK")
</pallas_src>

<mosaic_0001>
module attributes {stable_mosaic.version = 11 : i64} {
  func.func @_fused_forward_kernel(%arg0: i32, %arg1: memref<16x32xf32, #tpu.memory_space<vmem>>, %arg2: memref<16x1xf32, #tpu.memory_space<vmem>>, %arg3: memref<1x16xf32, #tpu.memory_space<vmem>>, %arg4: memref<1x32xf32, #tpu.memory_space<vmem>>, %arg5: memref<1x32xf32, #tpu.memory_space<vmem>>, %arg6: memref<1x32x96xbf16, #tpu.memory_space<vmem>>, %arg7: memref<1x1x96xf32, #tpu.memory_space<vmem>>, %arg8: memref<1x32x32xbf16, #tpu.memory_space<vmem>>, %arg9: memref<1x1x32xf32, #tpu.memory_space<vmem>>, %arg10: memref<1x1x32xf32, #tpu.memory_space<vmem>>, %arg11: memref<1x1x32xf32, #tpu.memory_space<vmem>>, %arg12: memref<1x32x64xbf16, #tpu.memory_space<vmem>>, %arg13: memref<1x1x64xf32, #tpu.memory_space<vmem>>, %arg14: memref<1x64x32xbf16, #tpu.memory_space<vmem>>, %arg15: memref<1x1x32xf32, #tpu.memory_space<vmem>>, %arg16: memref<1x1x32xf32, #tpu.memory_space<vmem>>, %arg17: memref<1x1x32xf32, #tpu.memory_space<vmem>>, %arg18: memref<32x128xbf16, #tpu.memory_space<vmem>>, %arg19: memref<1x128xf32, #tpu.memory_space<vmem>>, %arg20: memref<2x128xf32, #tpu.memory_space<vmem>>, %arg21: memref<2x128xf32, #tpu.memory_space<vmem>>, %arg22: memref<1x1xf32, #tpu.memory_space<vmem>>, %arg23: memref<16x32xf32, #tpu.memory_space<vmem>>, %arg24: memref<16x32xf32, #tpu.memory_space<vmem>>) attributes {dimension_semantics = [#tpu.dimension_semantics<arbitrary>], iteration_bounds = array<i64: 2>, scalar_prefetch = 0 : i64, scratch_operands = 2 : i64, tpu.core_type = #tpu.core_type<tc>, window_params = [{pipeline_mode = #tpu.pipeline_mode<synchronous>, transform_indices = @transform_0, window_bounds = array<i64: 16, 32>}, {pipeline_mode = #tpu.pipeline_mode<synchronous>, transform_indices = @transform_1, window_bounds = array<i64: 16, 1>}, {pipeline_mode = #tpu.pipeline_mode<synchronous>, transform_indices = @transform_2, window_bounds = array<i64: 1, 16>}, {pipeline_mode = #tpu.pipeline_mode<synchronous>, transform_indices = @transform_3, window_bounds = array<i64: 1, 32>}, {pipeline_mode = #tpu.pipeline_mode<synchronous>, transform_indices = @transform_4, window_bounds = array<i64: 1, 32>}, {transform_indices = @transform_5, window_bounds = array<i64: 1, 32, 96>}, {transform_indices = @transform_6, window_bounds = array<i64: 1, 1, 96>}, {transform_indices = @transform_7, window_bounds = array<i64: 1, 32, 32>}, {transform_indices = @transform_8, window_bounds = array<i64: 1, 1, 32>}, {transform_indices = @transform_9, window_bounds = array<i64: 1, 1, 32>}, {transform_indices = @transform_10, window_bounds = array<i64: 1, 1, 32>}, {transform_indices = @transform_11, window_bounds = array<i64: 1, 32, 64>}, {transform_indices = @transform_12, window_bounds = array<i64: 1, 1, 64>}, {transform_indices = @transform_13, window_bounds = array<i64: 1, 64, 32>}, {transform_indices = @transform_14, window_bounds = array<i64: 1, 1, 32>}, {transform_indices = @transform_15, window_bounds = array<i64: 1, 1, 32>}, {transform_indices = @transform_16, window_bounds = array<i64: 1, 1, 32>}, {pipeline_mode = #tpu.pipeline_mode<synchronous>, transform_indices = @transform_17, window_bounds = array<i64: 32, 128>}, {pipeline_mode = #tpu.pipeline_mode<synchronous>, transform_indices = @transform_18, window_bounds = array<i64: 1, 128>}, {pipeline_mode = #tpu.pipeline_mode<synchronous>, transform_indices = @transform_19, window_bounds = array<i64: 2, 128>}, {pipeline_mode = #tpu.pipeline_mode<synchronous>, transform_indices = @transform_20, window_bounds = array<i64: 2, 128>}, {pipeline_mode = #tpu.pipeline_mode<synchronous>, transform_indices = @transform_21, window_bounds = array<i64: 1, 1>}]} {
    %c0_i32 = arith.constant 0 : i32
    %0 = arith.cmpi eq, %arg0, %c0_i32 : i32
    %1 = arith.extui %0 : i1 to i32
    %c0_i32_0 = arith.constant 0 : i32
    %2 = arith.cmpi ne, %1, %c0_i32_0 : i32
    scf.if %2 {
      %c0_89 = arith.constant 0 : index
      %c0_90 = arith.constant 0 : index
      %190 = vector.load %arg1[%c0_89, %c0_90] : memref<16x32xf32, #tpu.memory_space<vmem>>, vector<16x32xf32>
      %c0_91 = arith.constant 0 : index
      %c0_92 = arith.constant 0 : index
      %191 = vector.load %arg4[%c0_91, %c0_92] : memref<1x32xf32, #tpu.memory_space<vmem>>, vector<1x32xf32>
      %c0_93 = arith.constant 0 : index
      %c0_94 = arith.constant 0 : index
      %192 = vector.load %arg5[%c0_93, %c0_94] : memref<1x32xf32, #tpu.memory_space<vmem>>, vector<1x32xf32>
      %cst_95 = arith.constant dense<0.000000e+00> : vector<16xf32>
      %193 = vector.multi_reduction <add>, %190, %cst_95 [1] : vector<16x32xf32> to vector<16xf32>
      %194 = vector.shape_cast %193 : vector<16xf32> to vector<16x1xf32>
      %cst_96 = arith.constant 3.200000e+01 : f32
      %195 = vector.broadcast %cst_96 : f32 to vector<16x1xf32>
      %196 = arith.divf %194, %195 : vector<16x1xf32>
      %197 = vector.broadcast %196 : vector<16x1xf32> to vector<16x32xf32>
      %198 = arith.subf %190, %197 : vector<16x32xf32>
      %199 = arith.mulf %198, %198 : vector<16x32xf32>
      %cst_97 = arith.constant dense<0.000000e+00> : vector<16xf32>
      %200 = vector.multi_reduction <add>, %199, %cst_97 [1] : vector<16x32xf32> to vector<16xf32>
      %201 = vector.shape_cast %200 : vector<16xf32> to vector<16x1xf32>
      %cst_98 = arith.constant 3.200000e+01 : f32
      %202 = vector.broadcast %cst_98 : f32 to vector<16x1xf32>
      %203 = arith.divf %201, %202 : vector<16x1xf32>
      %204 = vector.broadcast %196 : vector<16x1xf32> to vector<16x32xf32>
      %205 = arith.subf %190, %204 : vector<16x32xf32>
      %cst_99 = arith.constant 9.99999974E-6 : f32
      %206 = vector.broadcast %cst_99 : f32 to vector<16x1xf32>
      %207 = arith.addf %203, %206 : vector<16x1xf32>
      %208 = math.rsqrt %207 : vector<16x1xf32>
      %209 = vector.broadcast %208 : vector<16x1xf32> to vector<16x32xf32>
      %210 = arith.mulf %205, %209 : vector<16x32xf32>
      %211 = vector.broadcast %191 : vector<1x32xf32> to vector<16x32xf32>
      %212 = arith.mulf %210, %211 : vector<16x32xf32>
      %213 = vector.broadcast %192 : vector<1x32xf32> to vector<16x32xf32>
      %214 = arith.addf %212, %213 : vector<16x32xf32>
      %c0_100 = arith.constant 0 : index
      %c0_101 = arith.constant 0 : index
      %215 = vector.load %arg23[%c0_100, %c0_101] : memref<16x32xf32, #tpu.memory_space<vmem>>, vector<16x32xf32>
      tpu.vector_store %arg23[%c0_100, %c0_101], %214 {strides = array<i32>} : memref<16x32xf32, #tpu.memory_space<vmem>>, vector<16x32xf32>,
    } else {
    }
    %c0 = arith.constant 0 : index
    %c0_1 = arith.constant 0 : index
    %3 = vector.load %arg23[%c0, %c0_1] : memref<16x32xf32, #tpu.memory_space<vmem>>, vector<16x32xf32>
    %4 = arith.truncf %3 : vector<16x32xf32> to vector<16x32xbf16>
    %c0_2 = arith.constant 0 : index
    %c0_3 = arith.constant 0 : index
    %5 = vector.load %arg2[%c0_2, %c0_3] : memref<16x1xf32, #tpu.memory_space<vmem>>, vector<16x1xf32>
    %c0_4 = arith.constant 0 : index
    %c0_5 = arith.constant 0 : index
    %6 = vector.load %arg3[%c0_4, %c0_5] : memref<1x16xf32, #tpu.memory_space<vmem>>, vector<1x16xf32>
    %7 = vector.broadcast %5 : vector<16x1xf32> to vector<16x16xf32>
    %8 = vector.broadcast %6 : vector<1x16xf32> to vector<16x16xf32>
    %9 = arith.cmpf oeq, %7, %8 : vector<16x16xf32>
    %c0_6 = arith.constant 0 : index
    %c0_7 = arith.constant 0 : index
    %c0_8 = arith.constant 0 : index
    %10 = vector.load %arg6[%c0_6, %c0_7, %c0_8] : memref<1x32x96xbf16, #tpu.memory_space<vmem>>, vector<1x32x96xbf16>
    %11 = vector.shape_cast %10 : vector<1x32x96xbf16> to vector<32x96xbf16>
    %cst = arith.constant dense<0.000000e+00> : vector<16x96xf32>
    %12 = tpu.matmul %4, %11, %cst {dimension_numbers = #tpu.dot_dimension_numbers<[1], [0], [0], [1], [0, 0, 1, 1], [], []>} : vector<16x32xbf16>, vector<32x96xbf16>, vector<16x96xf32> -> vector<16x96xf32>
    %c0_9 = arith.constant 0 : index
    %c0_10 = arith.constant 0 : index
    %c0_11 = arith.constant 0 : index
    %13 = vector.load %arg7[%c0_9, %c0_10, %c0_11] : memref<1x1x96xf32, #tpu.memory_space<vmem>>, vector<1x1x96xf32>
    %14 = vector.shape_cast %13 : vector<1x1x96xf32> to vector<1x96xf32>
    %15 = vector.broadcast %14 : vector<1x96xf32> to vector<16x96xf32>
    %16 = arith.addf %12, %15 : vector<16x96xf32>
    %17 = arith.truncf %16 : vector<16x96xf32> to vector<16x96xbf16>
    %18 = vector.extract_strided_slice %17 {offsets = [0, 0], sizes = [16, 8], strides = [1, 1]} : vector<16x96xbf16> to vector<16x8xbf16>
    %19 = vector.extract_strided_slice %17 {offsets = [0, 32], sizes = [16, 8], strides = [1, 1]} : vector<16x96xbf16> to vector<16x8xbf16>
    %20 = vector.extract_strided_slice %17 {offsets = [0, 64], sizes = [16, 8], strides = [1, 1]} : vector<16x96xbf16> to vector<16x8xbf16>
    %cst_12 = arith.constant dense<0.000000e+00> : vector<16x16xf32>
    %21 = tpu.matmul %18, %19, %cst_12 {dimension_numbers = #tpu.dot_dimension_numbers<[1], [1], [0], [0], [0, 0, 1, 0], [], []>} : vector<16x8xbf16>, vector<16x8xbf16>, vector<16x16xf32> -> vector<16x16xf32>
    %cst_13 = arith.constant -1.000000e+30 : f32
    %22 = vector.broadcast %cst_13 : f32 to vector<16x16xf32>
    %23 = arith.select %9, %21, %22 : vector<16x16xi1>, vector<16x16xf32>
    %cst_14 = arith.constant dense<0xFF800000> : vector<16xf32>
    %24 = vector.multi_reduction <maximumf>, %23, %cst_14 [1] : vector<16x16xf32> to vector<16xf32>
    %25 = vector.shape_cast %24 : vector<16xf32> to vector<16x1xf32>
    %26 = vector.broadcast %25 : vector<16x1xf32> to vector<16x16xf32>
    %27 = arith.subf %23, %26 : vector<16x16xf32>
    %28 = math.exp %27 : vector<16x16xf32>
    %cst_15 = arith.constant dense<0.000000e+00> : vector<16xf32>
    %29 = vector.multi_reduction <add>, %28, %cst_15 [1] : vector<16x16xf32> to vector<16xf32>
    %30 = vector.shape_cast %29 : vector<16xf32> to vector<16x1xf32>
    %31 = tpu.reciprocal %30 {approx = true} : vector<16x1xf32> -> vector<16x1xf32>
    %32 = vector.broadcast %31 : vector<16x1xf32> to vector<16x16xf32>
    %33 = arith.mulf %28, %32 : vector<16x16xf32>
    %34 = arith.truncf %33 : vector<16x16xf32> to vector<16x16xbf16>
    %cst_16 = arith.constant dense<0.000000e+00> : vector<16x8xf32>
    %35 = tpu.matmul %34, %20, %cst_16 {dimension_numbers = #tpu.dot_dimension_numbers<[1], [0], [0], [1], [0, 0, 1, 1], [], []>} : vector<16x16xbf16>, vector<16x8xbf16>, vector<16x8xf32> -> vector<16x8xf32>
    %c0_17 = arith.constant 0 : index
    %c0_18 = arith.constant 0 : index
    %36 = vector.load %arg24[%c0_17, %c0_18] : memref<16x32xf32, #tpu.memory_space<vmem>>, vector<16x8xf32>
    tpu.vector_store %arg24[%c0_17, %c0_18], %35 {strides = array<i32>} : memref<16x32xf32, #tpu.memory_space<vmem>>, vector<16x8xf32>,
    %37 = vector.extract_strided_slice %17 {offsets = [0, 8], sizes = [16, 8], strides = [1, 1]} : vector<16x96xbf16> to vector<16x8xbf16>
    %38 = vector.extract_strided_slice %17 {offsets = [0, 40], sizes = [16, 8], strides = [1, 1]} : vector<16x96xbf16> to vector<16x8xbf16>
    %39 = vector.extract_strided_slice %17 {offsets = [0, 72], sizes = [16, 8], strides = [1, 1]} : vector<16x96xbf16> to vector<16x8xbf16>
    %cst_19 = arith.constant dense<0.000000e+00> : vector<16x16xf32>
    %40 = tpu.matmul %37, %38, %cst_19 {dimension_numbers = #tpu.dot_dimension_numbers<[1], [1], [0], [0], [0, 0, 1, 0], [], []>} : vector<16x8xbf16>, vector<16x8xbf16>, vector<16x16xf32> -> vector<16x16xf32>
    %cst_20 = arith.constant -1.000000e+30 : f32
    %41 = vector.broadcast %cst_20 : f32 to vector<16x16xf32>
    %42 = arith.select %9, %40, %41 : vector<16x16xi1>, vector<16x16xf32>
    %cst_21 = arith.constant dense<0xFF800000> : vector<16xf32>
    %43 = vector.multi_reduction <maximumf>, %42, %cst_21 [1] : vector<16x16xf32> to vector<16xf32>
    %44 = vector.shape_cast %43 : vector<16xf32> to vector<16x1xf32>
    %45 = vector.broadcast %44 : vector<16x1xf32> to vector<16x16xf32>
    %46 = arith.subf %42, %45 : vector<16x16xf32>
    %47 = math.exp %46 : vector<16x16xf32>
    %cst_22 = arith.constant dense<0.000000e+00> : vector<16xf32>
    %48 = vector.multi_reduction <add>, %47, %cst_22 [1] : vector<16x16xf32> to vector<16xf32>
    %49 = vector.shape_cast %48 : vector<16xf32> to vector<16x1xf32>
    %50 = tpu.reciprocal %49 {approx = true} : vector<16x1xf32> -> vector<16x1xf32>
    %51 = vector.broadcast %50 : vector<16x1xf32> to vector<16x16xf32>
    %52 = arith.mulf %47, %51 : vector<16x16xf32>
    %53 = arith.truncf %52 : vector<16x16xf32> to vector<16x16xbf16>
    %cst_23 = arith.constant dense<0.000000e+00> : vector<16x8xf32>
    %54 = tpu.matmul %53, %39, %cst_23 {dimension_numbers = #tpu.dot_dimension_numbers<[1], [0], [0], [1], [0, 0, 1, 1], [], []>} : vector<16x16xbf16>, vector<16x8xbf16>, vector<16x8xf32> -> vector<16x8xf32>
    %c0_24 = arith.constant 0 : index
    %c8 = arith.constant 8 : index
    %55 = vector.load %arg24[%c0_24, %c8] : memref<16x32xf32, #tpu.memory_space<vmem>>, vector<16x8xf32>
    tpu.vector_store %arg24[%c0_24, %c8], %54 {strides = array<i32>} : memref<16x32xf32, #tpu.memory_space<vmem>>, vector<16x8xf32>,
    %56 = vector.extract_strided_slice %17 {offsets = [0, 16], sizes = [16, 8], strides = [1, 1]} : vector<16x96xbf16> to vector<16x8xbf16>
    %57 = vector.extract_strided_slice %17 {offsets = [0, 48], sizes = [16, 8], strides = [1, 1]} : vector<16x96xbf16> to vector<16x8xbf16>
    %58 = vector.extract_strided_slice %17 {offsets = [0, 80], sizes = [16, 8], strides = [1, 1]} : vector<16x96xbf16> to vector<16x8xbf16>
    %cst_25 = arith.constant dense<0.000000e+00> : vector<16x16xf32>
    %59 = tpu.matmul %56, %57, %cst_25 {dimension_numbers = #tpu.dot_dimension_numbers<[1], [1], [0], [0], [0, 0, 1, 0], [], []>} : vector<16x8xbf16>, vector<16x8xbf16>, vector<16x16xf32> -> vector<16x16xf32>
    %cst_26 = arith.constant -1.000000e+30 : f32
    %60 = vector.broadcast %cst_26 : f32 to vector<16x16xf32>
    %61 = arith.select %9, %59, %60 : vector<16x16xi1>, vector<16x16xf32>
    %cst_27 = arith.constant dense<0xFF800000> : vector<16xf32>
    %62 = vector.multi_reduction <maximumf>, %61, %cst_27 [1] : vector<16x16xf32> to vector<16xf32>
    %63 = vector.shape_cast %62 : vector<16xf32> to vector<16x1xf32>
    %64 = vector.broadcast %63 : vector<16x1xf32> to vector<16x16xf32>
    %65 = arith.subf %61, %64 : vector<16x16xf32>
    %66 = math.exp %65 : vector<16x16xf32>
    %cst_28 = arith.constant dense<0.000000e+00> : vector<16xf32>
    %67 = vector.multi_reduction <add>, %66, %cst_28 [1] : vector<16x16xf32> to vector<16xf32>
    %68 = vector.shape_cast %67 : vector<16xf32> to vector<16x1xf32>
    %69 = tpu.reciprocal %68 {approx = true} : vector<16x1xf32> -> vector<16x1xf32>
    %70 = vector.broadcast %69 : vector<16x1xf32> to vector<16x16xf32>
    %71 = arith.mulf %66, %70 : vector<16x16xf32>
    %72 = arith.truncf %71 : vector<16x16xf32> to vector<16x16xbf16>
    %cst_29 = arith.constant dense<0.000000e+00> : vector<16x8xf32>
    %73 = tpu.matmul %72, %58, %cst_29 {dimension_numbers = #tpu.dot_dimension_numbers<[1], [0], [0], [1], [0, 0, 1, 1], [], []>} : vector<16x16xbf16>, vector<16x8xbf16>, vector<16x8xf32> -> vector<16x8xf32>
    %c0_30 = arith.constant 0 : index
    %c16 = arith.constant 16 : index
    %74 = vector.load %arg24[%c0_30, %c16] : memref<16x32xf32, #tpu.memory_space<vmem>>, vector<16x8xf32>
    tpu.vector_store %arg24[%c0_30, %c16], %73 {strides = array<i32>} : memref<16x32xf32, #tpu.memory_space<vmem>>, vector<16x8xf32>,
    %75 = vector.extract_strided_slice %17 {offsets = [0, 24], sizes = [16, 8], strides = [1, 1]} : vector<16x96xbf16> to vector<16x8xbf16>
    %76 = vector.extract_strided_slice %17 {offsets = [0, 56], sizes = [16, 8], strides = [1, 1]} : vector<16x96xbf16> to vector<16x8xbf16>
    %77 = vector.extract_strided_slice %17 {offsets = [0, 88], sizes = [16, 8], strides = [1, 1]} : vector<16x96xbf16> to vector<16x8xbf16>
    %cst_31 = arith.constant dense<0.000000e+00> : vector<16x16xf32>
    %78 = tpu.matmul %75, %76, %cst_31 {dimension_numbers = #tpu.dot_dimension_numbers<[1], [1], [0], [0], [0, 0, 1, 0], [], []>} : vector<16x8xbf16>, vector<16x8xbf16>, vector<16x16xf32> -> vector<16x16xf32>
    %cst_32 = arith.constant -1.000000e+30 : f32
    %79 = vector.broadcast %cst_32 : f32 to vector<16x16xf32>
    %80 = arith.select %9, %78, %79 : vector<16x16xi1>, vector<16x16xf32>
    %cst_33 = arith.constant dense<0xFF800000> : vector<16xf32>
    %81 = vector.multi_reduction <maximumf>, %80, %cst_33 [1] : vector<16x16xf32> to vector<16xf32>
    %82 = vector.shape_cast %81 : vector<16xf32> to vector<16x1xf32>
    %83 = vector.broadcast %82 : vector<16x1xf32> to vector<16x16xf32>
    %84 = arith.subf %80, %83 : vector<16x16xf32>
    %85 = math.exp %84 : vector<16x16xf32>
    %cst_34 = arith.constant dense<0.000000e+00> : vector<16xf32>
    %86 = vector.multi_reduction <add>, %85, %cst_34 [1] : vector<16x16xf32> to vector<16xf32>
    %87 = vector.shape_cast %86 : vector<16xf32> to vector<16x1xf32>
    %88 = tpu.reciprocal %87 {approx = true} : vector<16x1xf32> -> vector<16x1xf32>
    %89 = vector.broadcast %88 : vector<16x1xf32> to vector<16x16xf32>
    %90 = arith.mulf %85, %89 : vector<16x16xf32>
    %91 = arith.truncf %90 : vector<16x16xf32> to vector<16x16xbf16>
    %cst_35 = arith.constant dense<0.000000e+00> : vector<16x8xf32>
    %92 = tpu.matmul %91, %77, %cst_35 {dimension_numbers = #tpu.dot_dimension_numbers<[1], [0], [0], [1], [0, 0, 1, 1], [], []>} : vector<16x16xbf16>, vector<16x8xbf16>, vector<16x8xf32> -> vector<16x8xf32>
    %c0_36 = arith.constant 0 : index
    %c24 = arith.constant 24 : index
    %93 = vector.load %arg24[%c0_36, %c24] : memref<16x32xf32, #tpu.memory_space<vmem>>, vector<16x8xf32>
    tpu.vector_store %arg24[%c0_36, %c24], %92 {strides = array<i32>} : memref<16x32xf32, #tpu.memory_space<vmem>>, vector<16x8xf32>,
    %c0_37 = arith.constant 0 : index
    %c0_38 = arith.constant 0 : index
    %94 = vector.load %arg24[%c0_37, %c0_38] : memref<16x32xf32, #tpu.memory_space<vmem>>, vector<16x32xf32>
    %95 = arith.truncf %94 : vector<16x32xf32> to vector<16x32xbf16>
    %c0_39 = arith.constant 0 : index
    %c0_40 = arith.constant 0 : index
    %c0_41 = arith.constant 0 : index
    %96 = vector.load %arg8[%c0_39, %c0_40, %c0_41] : memref<1x32x32xbf16, #tpu.memory_space<vmem>>, vector<1x32x32xbf16>
    %97 = vector.shape_cast %96 : vector<1x32x32xbf16> to vector<32x32xbf16>
    %cst_42 = arith.constant dense<0.000000e+00> : vector<16x32xf32>
    %98 = tpu.matmul %95, %97, %cst_42 {dimension_numbers = #tpu.dot_dimension_numbers<[1], [0], [0], [1], [0, 0, 1, 1], [], []>} : vector<16x32xbf16>, vector<32x32xbf16>, vector<16x32xf32> -> vector<16x32xf32>
    %c0_43 = arith.constant 0 : index
    %c0_44 = arith.constant 0 : index
    %c0_45 = arith.constant 0 : index
    %99 = vector.load %arg9[%c0_43, %c0_44, %c0_45] : memref<1x1x32xf32, #tpu.memory_space<vmem>>, vector<1x1x32xf32>
    %100 = vector.shape_cast %99 : vector<1x1x32xf32> to vector<1x32xf32>
    %101 = vector.broadcast %100 : vector<1x32xf32> to vector<16x32xf32>
    %102 = arith.addf %98, %101 : vector<16x32xf32>
    %103 = arith.addf %3, %102 : vector<16x32xf32>
    %c0_46 = arith.constant 0 : index
    %c0_47 = arith.constant 0 : index
    %c0_48 = arith.constant 0 : index
    %104 = vector.load %arg10[%c0_46, %c0_47, %c0_48] : memref<1x1x32xf32, #tpu.memory_space<vmem>>, vector<1x1x32xf32>
    %105 = vector.shape_cast %104 : vector<1x1x32xf32> to vector<1x32xf32>
    %c0_49 = arith.constant 0 : index
    %c0_50 = arith.constant 0 : index
    %c0_51 = arith.constant 0 : index
    %106 = vector.load %arg11[%c0_49, %c0_50, %c0_51] : memref<1x1x32xf32, #tpu.memory_space<vmem>>, vector<1x1x32xf32>
    %107 = vector.shape_cast %106 : vector<1x1x32xf32> to vector<1x32xf32>
    %cst_52 = arith.constant dense<0.000000e+00> : vector<16xf32>
    %108 = vector.multi_reduction <add>, %103, %cst_52 [1] : vector<16x32xf32> to vector<16xf32>
    %109 = vector.shape_cast %108 : vector<16xf32> to vector<16x1xf32>
    %cst_53 = arith.constant 3.200000e+01 : f32
    %110 = vector.broadcast %cst_53 : f32 to vector<16x1xf32>
    %111 = arith.divf %109, %110 : vector<16x1xf32>
    %112 = vector.broadcast %111 : vector<16x1xf32> to vector<16x32xf32>
    %113 = arith.subf %103, %112 : vector<16x32xf32>
    %114 = arith.mulf %113, %113 : vector<16x32xf32>
    %cst_54 = arith.constant dense<0.000000e+00> : vector<16xf32>
    %115 = vector.multi_reduction <add>, %114, %cst_54 [1] : vector<16x32xf32> to vector<16xf32>
    %116 = vector.shape_cast %115 : vector<16xf32> to vector<16x1xf32>
    %cst_55 = arith.constant 3.200000e+01 : f32
    %117 = vector.broadcast %cst_55 : f32 to vector<16x1xf32>
    %118 = arith.divf %116, %117 : vector<16x1xf32>
    %119 = vector.broadcast %111 : vector<16x1xf32> to vector<16x32xf32>
    %120 = arith.subf %103, %119 : vector<16x32xf32>
    %cst_56 = arith.constant 9.99999974E-6 : f32
    %121 = vector.broadcast %cst_56 : f32 to vector<16x1xf32>
    %122 = arith.addf %118, %121 : vector<16x1xf32>
    %123 = math.rsqrt %122 : vector<16x1xf32>
    %124 = vector.broadcast %123 : vector<16x1xf32> to vector<16x32xf32>
    %125 = arith.mulf %120, %124 : vector<16x32xf32>
    %126 = vector.broadcast %105 : vector<1x32xf32> to vector<16x32xf32>
    %127 = arith.mulf %125, %126 : vector<16x32xf32>
    %128 = vector.broadcast %107 : vector<1x32xf32> to vector<16x32xf32>
    %129 = arith.addf %127, %128 : vector<16x32xf32>
    %130 = arith.truncf %129 : vector<16x32xf32> to vector<16x32xbf16>
    %c0_57 = arith.constant 0 : index
    %c0_58 = arith.constant 0 : index
    %c0_59 = arith.constant 0 : index
    %131 = vector.load %arg12[%c0_57, %c0_58, %c0_59] : memref<1x32x64xbf16, #tpu.memory_space<vmem>>, vector<1x32x64xbf16>
    %132 = vector.shape_cast %131 : vector<1x32x64xbf16> to vector<32x64xbf16>
    %cst_60 = arith.constant dense<0.000000e+00> : vector<16x64xf32>
    %133 = tpu.matmul %130, %132, %cst_60 {dimension_numbers = #tpu.dot_dimension_numbers<[1], [0], [0], [1], [0, 0, 1, 1], [], []>} : vector<16x32xbf16>, vector<32x64xbf16>, vector<16x64xf32> -> vector<16x64xf32>
    %c0_61 = arith.constant 0 : index
    %c0_62 = arith.constant 0 : index
    %c0_63 = arith.constant 0 : index
    %134 = vector.load %arg13[%c0_61, %c0_62, %c0_63] : memref<1x1x64xf32, #tpu.memory_space<vmem>>, vector<1x1x64xf32>
    %135 = vector.shape_cast %134 : vector<1x1x64xf32> to vector<1x64xf32>
    %136 = vector.broadcast %135 : vector<1x64xf32> to vector<16x64xf32>
    %137 = arith.addf %133, %136 : vector<16x64xf32>
    %cst_64 = arith.constant 5.000000e-01 : f32
    %138 = vector.broadcast %cst_64 : f32 to vector<16x64xf32>
    %139 = arith.mulf %138, %137 : vector<16x64xf32>
    %cst_65 = arith.constant 4.471500e-02 : f32
    %140 = vector.broadcast %cst_65 : f32 to vector<16x64xf32>
    %141 = arith.mulf %140, %137 : vector<16x64xf32>
    %142 = arith.mulf %141, %137 : vector<16x64xf32>
    %143 = arith.mulf %142, %137 : vector<16x64xf32>
    %144 = arith.addf %137, %143 : vector<16x64xf32>
    %cst_66 = arith.constant 0.797884583 : f32
    %145 = vector.broadcast %cst_66 : f32 to vector<16x64xf32>
    %146 = arith.mulf %145, %144 : vector<16x64xf32>
    %147 = math.tanh %146 : vector<16x64xf32>
    %cst_67 = arith.constant 1.000000e+00 : f32
    %148 = vector.broadcast %cst_67 : f32 to vector<16x64xf32>
    %149 = arith.addf %148, %147 : vector<16x64xf32>
    %150 = arith.mulf %139, %149 : vector<16x64xf32>
    %151 = arith.truncf %150 : vector<16x64xf32> to vector<16x64xbf16>
    %c0_68 = arith.constant 0 : index
    %c0_69 = arith.constant 0 : index
    %c0_70 = arith.constant 0 : index
    %152 = vector.load %arg14[%c0_68, %c0_69, %c0_70] : memref<1x64x32xbf16, #tpu.memory_space<vmem>>, vector<1x64x32xbf16>
    %153 = vector.shape_cast %152 : vector<1x64x32xbf16> to vector<64x32xbf16>
    %cst_71 = arith.constant dense<0.000000e+00> : vector<16x32xf32>
    %154 = tpu.matmul %151, %153, %cst_71 {dimension_numbers = #tpu.dot_dimension_numbers<[1], [0], [0], [1], [0, 0, 1, 1], [], []>} : vector<16x64xbf16>, vector<64x32xbf16>, vector<16x32xf32> -> vector<16x32xf32>
    %c0_72 = arith.constant 0 : index
    %c0_73 = arith.constant 0 : index
    %c0_74 = arith.constant 0 : index
    %155 = vector.load %arg15[%c0_72, %c0_73, %c0_74] : memref<1x1x32xf32, #tpu.memory_space<vmem>>, vector<1x1x32xf32>
    %156 = vector.shape_cast %155 : vector<1x1x32xf32> to vector<1x32xf32>
    %157 = vector.broadcast %156 : vector<1x32xf32> to vector<16x32xf32>
    %158 = arith.addf %154, %157 : vector<16x32xf32>
    %159 = arith.addf %129, %158 : vector<16x32xf32>
    %c0_75 = arith.constant 0 : index
    %c0_76 = arith.constant 0 : index
    %c0_77 = arith.constant 0 : index
    %160 = vector.load %arg16[%c0_75, %c0_76, %c0_77] : memref<1x1x32xf32, #tpu.memory_space<vmem>>, vector<1x1x32xf32>
    %161 = vector.shape_cast %160 : vector<1x1x32xf32> to vector<1x32xf32>
    %c0_78 = arith.constant 0 : index
    %c0_79 = arith.constant 0 : index
    %c0_80 = arith.constant 0 : index
    %162 = vector.load %arg17[%c0_78, %c0_79, %c0_80] : memref<1x1x32xf32, #tpu.memory_space<vmem>>, vector<1x1x32xf32>
    %163 = vector.shape_cast %162 : vector<1x1x32xf32> to vector<1x32xf32>
    %cst_81 = arith.constant dense<0.000000e+00> : vector<16xf32>
    %164 = vector.multi_reduction <add>, %159, %cst_81 [1] : vector<16x32xf32> to vector<16xf32>
    %165 = vector.shape_cast %164 : vector<16xf32> to vector<16x1xf32>
    %cst_82 = arith.constant 3.200000e+01 : f32
    %166 = vector.broadcast %cst_82 : f32 to vector<16x1xf32>
    %167 = arith.divf %165, %166 : vector<16x1xf32>
    %168 = vector.broadcast %167 : vector<16x1xf32> to vector<16x32xf32>
    %169 = arith.subf %159, %168 : vector<16x32xf32>
    %170 = arith.mulf %169, %169 : vector<16x32xf32>
    %cst_83 = arith.constant dense<0.000000e+00> : vector<16xf32>
    %171 = vector.multi_reduction <add>, %170, %cst_83 [1] : vector<16x32xf32> to vector<16xf32>
    %172 = vector.shape_cast %171 : vector<16xf32> to vector<16x1xf32>
    %cst_84 = arith.constant 3.200000e+01 : f32
    %173 = vector.broadcast %cst_84 : f32 to vector<16x1xf32>
    %174 = arith.divf %172, %173 : vector<16x1xf32>
    %175 = vector.broadcast %167 : vector<16x1xf32> to vector<16x32xf32>
    %176 = arith.subf %159, %175 : vector<16x32xf32>
    %cst_85 = arith.constant 9.99999974E-6 : f32
    %177 = vector.broadcast %cst_85 : f32 to vector<16x1xf32>
    %178 = arith.addf %174, %177 : vector<16x1xf32>
    %179 = math.rsqrt %178 : vector<16x1xf32>
    %180 = vector.broadcast %179 : vector<16x1xf32> to vector<16x32xf32>
    %181 = arith.mulf %176, %180 : vector<16x32xf32>
    %182 = vector.broadcast %161 : vector<1x32xf32> to vector<16x32xf32>
    %183 = arith.mulf %181, %182 : vector<16x32xf32>
    %184 = vector.broadcast %163 : vector<1x32xf32> to vector<16x32xf32>
    %185 = arith.addf %183, %184 : vector<16x32xf32>
    %c0_86 = arith.constant 0 : index
    %c0_87 = arith.constant 0 : index
    %186 = vector.load %arg23[%c0_86, %c0_87] : memref<16x32xf32, #tpu.memory_space<vmem>>, vector<16x32xf32>
    tpu.vector_store %arg23[%c0_86, %c0_87], %185 {strides = array<i32>} : memref<16x32xf32, #tpu.memory_space<vmem>>, vector<16x32xf32>,
    %c1_i32 = arith.constant 1 : i32
    %187 = arith.cmpi eq, %arg0, %c1_i32 : i32
    %188 = arith.extui %187 : i1 to i32
    %c0_i32_88 = arith.constant 0 : i32
    %189 = arith.cmpi ne, %188, %c0_i32_88 : i32
    scf.if %189 {
      %c0_89 = arith.constant 0 : index
      %c0_90 = arith.constant 0 : index
      %190 = tpu.strided_load %arg23[%c0_89, %c0_90] {strides = array<i32: 8, 1>} : memref<16x32xf32, #tpu.memory_space<vmem>>, vector<2x32xf32>
      %191 = arith.truncf %190 : vector<2x32xf32> to vector<2x32xbf16>
      %c0_91 = arith.constant 0 : index
      %c0_92 = arith.constant 0 : index
      %192 = vector.load %arg18[%c0_91, %c0_92] : memref<32x128xbf16, #tpu.memory_space<vmem>>, vector<32x128xbf16>
      %cst_93 = arith.constant dense<0.000000e+00> : vector<2x128xf32>
      %193 = tpu.matmul %191, %192, %cst_93 {dimension_numbers = #tpu.dot_dimension_numbers<[1], [0], [0], [1], [0, 0, 1, 1], [], []>} : vector<2x32xbf16>, vector<32x128xbf16>, vector<2x128xf32> -> vector<2x128xf32>
      %c0_94 = arith.constant 0 : index
      %c0_95 = arith.constant 0 : index
      %194 = vector.load %arg19[%c0_94, %c0_95] : memref<1x128xf32, #tpu.memory_space<vmem>>, vector<1x128xf32>
      %195 = vector.broadcast %194 : vector<1x128xf32> to vector<2x128xf32>
      %196 = arith.addf %193, %195 : vector<2x128xf32>
      %c0_96 = arith.constant 0 : index
      %c0_97 = arith.constant 0 : index
      %197 = vector.load %arg21[%c0_96, %c0_97] : memref<2x128xf32, #tpu.memory_space<vmem>>, vector<2x128xf32>
      tpu.vector_store %arg21[%c0_96, %c0_97], %196 {strides = array<i32>} : memref<2x128xf32, #tpu.memory_space<vmem>>, vector<2x128xf32>,
      %cst_98 = arith.constant dense<0xFF800000> : vector<2xf32>
      %198 = vector.multi_reduction <maximumf>, %196, %cst_98 [1] : vector<2x128xf32> to vector<2xf32>
      %199 = vector.shape_cast %198 : vector<2xf32> to vector<2x1xf32>
      %200 = vector.broadcast %199 : vector<2x1xf32> to vector<2x128xf32>
      %201 = arith.subf %196, %200 : vector<2x128xf32>
      %202 = math.exp %201 : vector<2x128xf32>
      %cst_99 = arith.constant dense<0.000000e+00> : vector<2xf32>
      %203 = vector.multi_reduction <add>, %202, %cst_99 [1] : vector<2x128xf32> to vector<2xf32>
      %204 = vector.shape_cast %203 : vector<2xf32> to vector<2x1xf32>
      %205 = math.log %204 : vector<2x1xf32>
      %206 = arith.addf %205, %199 : vector<2x1xf32>
      %c0_100 = arith.constant 0 : index
      %c0_101 = arith.constant 0 : index
      %207 = vector.load %arg20[%c0_100, %c0_101] : memref<2x128xf32, #tpu.memory_space<vmem>>, vector<2x128xf32>
      %208 = vector.broadcast %206 : vector<2x1xf32> to vector<2x128xf32>
      %209 = arith.subf %196, %208 : vector<2x128xf32>
      %210 = arith.mulf %207, %209 : vector<2x128xf32>
      %cst_102 = arith.constant dense<0.000000e+00> : vector<2xf32>
      %211 = vector.multi_reduction <add>, %210, %cst_102 [1] : vector<2x128xf32> to vector<2xf32>
      %212 = vector.shape_cast %211 : vector<2xf32> to vector<2x1xf32>
      %cst_103 = arith.constant 0.000000e+00 : f32
      %213 = vector.broadcast %cst_103 : f32 to vector<2x1xf32>
      %214 = arith.subf %213, %212 : vector<2x1xf32>
      %cst_104 = arith.constant dense<0.000000e+00> : vector<1xf32>
      %215 = vector.multi_reduction <add>, %214, %cst_104 [0] : vector<2x1xf32> to vector<1xf32>
      %216 = vector.shape_cast %215 : vector<1xf32> to vector<1x1xf32>
      %cst_105 = arith.constant 5.000000e-01 : f32
      %217 = vector.broadcast %cst_105 : f32 to vector<1x1xf32>
      %218 = arith.mulf %216, %217 : vector<1x1xf32>
      %c0_106 = arith.constant 0 : index
      %c0_107 = arith.constant 0 : index
      %219 = vector.load %arg22[%c0_106, %c0_107] : memref<1x1xf32, #tpu.memory_space<vmem>>, vector<1x1xf32>
      tpu.vector_store %arg22[%c0_106, %c0_107], %218 {strides = array<i32>} : memref<1x1xf32, #tpu.memory_space<vmem>>, vector<1x1xf32>,
    } else {
    }
    return
  }
  func.func @transform_0(%arg0: i32) -> (i32, i32) {
    %c0_i32 = arith.constant 0 : i32
    %c0_i32_0 = arith.constant 0 : i32
    %c0_i32_1 = arith.constant 0 : i32
    return %c0_i32, %c0_i32_0 : i32, i32
  }
  func.func @transform_1(%arg0: i32) -> (i32, i32) {
    %c0_i32 = arith.constant 0 : i32
    %c0_i32_0 = arith.constant 0 : i32
    %c0_i32_1 = arith.constant 0 : i32
    return %c0_i32, %c0_i32_0 : i32, i32
  }
  func.func @transform_2(%arg0: i32) -> (i32, i32) {
    %c0_i32 = arith.constant 0 : i32
    %c0_i32_0 = arith.constant 0 : i32
    %c0_i32_1 = arith.constant 0 : i32
    return %c0_i32, %c0_i32_0 : i32, i32
  }
  func.func @transform_3(%arg0: i32) -> (i32, i32) {
    %c0_i32 = arith.constant 0 : i32
    %c0_i32_0 = arith.constant 0 : i32
    %c0_i32_1 = arith.constant 0 : i32
    return %c0_i32, %c0_i32_0 : i32, i32
  }
  func.func @transform_4(%arg0: i32) -> (i32, i32) {
    %c0_i32 = arith.constant 0 : i32
    %c0_i32_0 = arith.constant 0 : i32
    %c0_i32_1 = arith.constant 0 : i32
    return %c0_i32, %c0_i32_0 : i32, i32
  }
  func.func @transform_5(%arg0: i32) -> (i32, i32, i32) {
    %c0_i32 = arith.constant 0 : i32
    %c0_i32_0 = arith.constant 0 : i32
    %c0_i32_1 = arith.constant 0 : i32
    return %arg0, %c0_i32, %c0_i32_0 : i32, i32, i32
  }
  func.func @transform_6(%arg0: i32) -> (i32, i32, i32) {
    %c0_i32 = arith.constant 0 : i32
    %c0_i32_0 = arith.constant 0 : i32
    %c0_i32_1 = arith.constant 0 : i32
    return %arg0, %c0_i32, %c0_i32_0 : i32, i32, i32
  }
  func.func @transform_7(%arg0: i32) -> (i32, i32, i32) {
    %c0_i32 = arith.constant 0 : i32
    %c0_i32_0 = arith.constant 0 : i32
    %c0_i32_1 = arith.constant 0 : i32
    return %arg0, %c0_i32, %c0_i32_0 : i32, i32, i32
  }
  func.func @transform_8(%arg0: i32) -> (i32, i32, i32) {
    %c0_i32 = arith.constant 0 : i32
    %c0_i32_0 = arith.constant 0 : i32
    %c0_i32_1 = arith.constant 0 : i32
    return %arg0, %c0_i32, %c0_i32_0 : i32, i32, i32
  }
  func.func @transform_9(%arg0: i32) -> (i32, i32, i32) {
    %c0_i32 = arith.constant 0 : i32
    %c0_i32_0 = arith.constant 0 : i32
    %c0_i32_1 = arith.constant 0 : i32
    return %arg0, %c0_i32, %c0_i32_0 : i32, i32, i32
  }
  func.func @transform_10(%arg0: i32) -> (i32, i32, i32) {
    %c0_i32 = arith.constant 0 : i32
    %c0_i32_0 = arith.constant 0 : i32
    %c0_i32_1 = arith.constant 0 : i32
    return %arg0, %c0_i32, %c0_i32_0 : i32, i32, i32
  }
  func.func @transform_11(%arg0: i32) -> (i32, i32, i32) {
    %c0_i32 = arith.constant 0 : i32
    %c0_i32_0 = arith.constant 0 : i32
    %c0_i32_1 = arith.constant 0 : i32
    return %arg0, %c0_i32, %c0_i32_0 : i32, i32, i32
  }
  func.func @transform_12(%arg0: i32) -> (i32, i32, i32) {
    %c0_i32 = arith.constant 0 : i32
    %c0_i32_0 = arith.constant 0 : i32
    %c0_i32_1 = arith.constant 0 : i32
    return %arg0, %c0_i32, %c0_i32_0 : i32, i32, i32
  }
  func.func @transform_13(%arg0: i32) -> (i32, i32, i32) {
    %c0_i32 = arith.constant 0 : i32
    %c0_i32_0 = arith.constant 0 : i32
    %c0_i32_1 = arith.constant 0 : i32
    return %arg0, %c0_i32, %c0_i32_0 : i32, i32, i32
  }
  func.func @transform_14(%arg0: i32) -> (i32, i32, i32) {
    %c0_i32 = arith.constant 0 : i32
    %c0_i32_0 = arith.constant 0 : i32
    %c0_i32_1 = arith.constant 0 : i32
    return %arg0, %c0_i32, %c0_i32_0 : i32, i32, i32
  }
  func.func @transform_15(%arg0: i32) -> (i32, i32, i32) {
    %c0_i32 = arith.constant 0 : i32
    %c0_i32_0 = arith.constant 0 : i32
    %c0_i32_1 = arith.constant 0 : i32
    return %arg0, %c0_i32, %c0_i32_0 : i32, i32, i32
  }
  func.func @transform_16(%arg0: i32) -> (i32, i32, i32) {
    %c0_i32 = arith.constant 0 : i32
    %c0_i32_0 = arith.constant 0 : i32
    %c0_i32_1 = arith.constant 0 : i32
    return %arg0, %c0_i32, %c0_i32_0 : i32, i32, i32
  }
  func.func @transform_17(%arg0: i32) -> (i32, i32) {
    %c0_i32 = arith.constant 0 : i32
    %c0_i32_0 = arith.constant 0 : i32
    %c0_i32_1 = arith.constant 0 : i32
    return %c0_i32, %c0_i32_0 : i32, i32
  }
  func.func @transform_18(%arg0: i32) -> (i32, i32) {
    %c0_i32 = arith.constant 0 : i32
    %c0_i32_0 = arith.constant 0 : i32
    %c0_i32_1 = arith.constant 0 : i32
    return %c0_i32, %c0_i32_0 : i32, i32
  }
  func.func @transform_19(%arg0: i32) -> (i32, i32) {
    %c0_i32 = arith.constant 0 : i32
    %c0_i32_0 = arith.constant 0 : i32
    %c0_i32_1 = arith.constant 0 : i32
    return %c0_i32, %c0_i32_0 : i32, i32
  }
  func.func @transform_20(%arg0: i32) -> (i32, i32) {
    %c0_i32 = arith.constant 0 : i32
    %c0_i32_0 = arith.constant 0 : i32
    %c0_i32_1 = arith.constant 0 : i32
    return %c0_i32, %c0_i32_0 : i32, i32
  }
  func.func @transform_21(%arg0: i32) -> (i32, i32) {
    %c0_i32 = arith.constant 0 : i32
    %c0_i32_0 = arith.constant 0 : i32
    %c0_i32_1 = arith.constant 0 : i32
    return %c0_i32, %c0_i32_0 : i32, i32
  }
}

</mosaic_0001>

<llo_original>
// kernel: tpu_custom_call.1
$region0: #{tpu_custom_call.1}
  #allocation0 [shape = 'u32[]', space=smem, size = 0x4, offset = 0x4, fixed_abs, tag = 'smem constant byte address 0x4 - core index']
  #allocation1 [shape = 'u32[144,128]{1,0:T(1,128)}', space=vmem, size = 0x12000, scoped, tag = 'internal scratch']
  #allocation2 [shape = 'f32[16,32]{1,0:T(8,128)}', space=vmem, size = 0x2000, scoped, tag = 'scratch operand']
  #allocation3 [shape = 'f32[16,32]{1,0:T(8,128)}', space=vmem, size = 0x2000, scoped, tag = 'scratch operand']
  %s0 = inlined_call_operand.hbm [shape: f32[16,32], index: 0, kind: input, shape index: {}]
  %s1 = inlined_call_operand.vmem [shape: f32[16,1], index: 1, kind: input, shape index: {}]
  %s2 = inlined_call_operand.hbm [shape: f32[1,16], index: 2, kind: input, shape index: {}]
  %s3 = inlined_call_operand.hbm [shape: f32[1,32], index: 3, kind: input, shape index: {}]
  %s4 = inlined_call_operand.hbm [shape: f32[1,32], index: 4, kind: input, shape index: {}]
  %s5 = inlined_call_operand.vmem [shape: bf16[2,32,96], index: 5, kind: input, shape index: {}]
  %s6 = inlined_call_operand.hbm [shape: f32[2,1,96], index: 6, kind: input, shape index: {}]
  %s7 = inlined_call_operand.vmem [shape: bf16[2,32,32], index: 7, kind: input, shape index: {}]
  %s8 = inlined_call_operand.hbm [shape: f32[2,1,32], index: 8, kind: input, shape index: {}]
  %s9 = inlined_call_operand.hbm [shape: f32[2,1,32], index: 9, kind: input, shape index: {}]
  %s10 = inlined_call_operand.hbm [shape: f32[2,1,32], index: 10, kind: input, shape index: {}]
  %s11 = inlined_call_operand.vmem [shape: bf16[2,32,64], index: 11, kind: input, shape index: {}]
  %s12 = inlined_call_operand.hbm [shape: f32[2,1,64], index: 12, kind: input, shape index: {}]
  %s13 = inlined_call_operand.vmem [shape: bf16[2,64,32], index: 13, kind: input, shape index: {}]
  %s14 = inlined_call_operand.hbm [shape: f32[2,1,32], index: 14, kind: input, shape index: {}]
  %s15 = inlined_call_operand.hbm [shape: f32[2,1,32], index: 15, kind: input, shape index: {}]
  %s16 = inlined_call_operand.hbm [shape: f32[2,1,32], index: 16, kind: input, shape index: {}]
  %s17 = inlined_call_operand.vmem [shape: bf16[32,128], index: 17, kind: input, shape index: {}]
  %s18 = inlined_call_operand.vmem [shape: f32[1,128], index: 18, kind: input, shape index: {}]
  %s19 = inlined_call_operand.vmem [shape: f32[2,128], index: 19, kind: input, shape index: {}]
  %s20 = inlined_call_operand.hbm [shape: f32[2,128], index: 20, kind: output, shape index: {0}]
  %s21 = inlined_call_operand.hbm [shape: f32[1,1], index: 21, kind: output, shape index: {1}]
  %22 = xla_tuple %s20, %s21
  %s23 = sld [smem:[#allocation0]]
  $region177: #{tpu_custom_call.1} parent=0
    _
  %s25 = ssub.s32 1, %s23
  %s26 = scalar_select 0, %s25, %s23
  $region1: #{tpu_custom_call.1} parent=0
    #allocation4 [shape = 'u8[8192]{0}', space=vmem, size = 0x2000, scoped, tag = 'input window, operand 0, single buffered']
    #allocation5 [shape = 's32[2]{0}', space=sflag, size = 0x8, scoped, tag = 'scoped memory for tpu_custom_call.1']
    #allocation6 [shape = 's32[2]{0}', space=sflag, size = 0x8, scoped, tag = 'scoped memory for tpu_custom_call.1']
    #allocation7 [shape = 'u8[512]{0}', space=vmem, size = 0x400, scoped, tag = 'input window, operand 2, single buffered']
    #allocation8 [shape = 's32[1]{0}', space=sflag, size = 0x4, scoped, tag = 'scoped memory for tpu_custom_call.1']
    #allocation9 [shape = 'u8[512]{0}', space=vmem, size = 0x400, scoped, tag = 'input window, operand 3, single buffered']
    #allocation10 [shape = 'u8[512]{0}', space=vmem, size = 0x400, scoped, tag = 'input window, operand 4, single buffered']
    #allocation11 [shape = 's32[1]{0}', space=sflag, size = 0x4, scoped, tag = 'scoped memory for tpu_custom_call.1']
    #allocation12 [shape = 'u8[1024]{0}', space=vmem, size = 0x400, scoped, tag = 'input window, operand 6']
    #allocation13 [shape = 'u8[1024]{0}', space=vmem, size = 0x400, scoped, tag = 'input window, operand 8']
    #allocation14 [shape = 'u8[1024]{0}', space=vmem, size = 0x400, scoped, tag = 'input window, operand 9']
    #allocation15 [shape = 'u8[1024]{0}', space=vmem, size = 0x400, scoped, tag = 'input window, operand 10']
    #allocation16 [shape = 'u8[1024]{0}', space=vmem, size = 0x400, scoped, tag = 'input window, operand 12']
    #allocation17 [shape = 'u8[1024]{0}', space=vmem, size = 0x400, scoped, tag = 'input window, operand 14']
    #allocation18 [shape = 'u8[1024]{0}', space=vmem, size = 0x400, scoped, tag = 'input window, operand 15']
    #allocation19 [shape = 'u8[1024]{0}', space=vmem, size = 0x400, scoped, tag = 'input window, operand 16']
    #allocation20 [shape = 'u8[1024]{0}', space=vmem, size = 0x400, scoped, tag = 'output window, operand 0, single buffered']
    #allocation21 [shape = 'u8[512]{0}', space=vmem, size = 0x400, scoped, tag = 'output window, operand 1, single buffered']
    #allocation22 [shape = 's32[1]{0}', space=sflag, size = 0x4, scoped, tag = 'scoped memory for tpu_custom_call.1']
    %27 = vsyncpa [#allocation5], 0
    %28 = vsyncpa [#allocation8], 0
    %29 = vsyncpa [#allocation11], 0
    %30 = vsyncpa [#allocation6], 0
    %31 = vsyncpa [#allocation22], 0
    loop: start=0, step=1, limit=4
    $region2: #{tpu_custom_call.1} parent=1 // loop_pre_header
      _
    $region3: #{tpu_custom_call.1} parent=1 // loop_header
      %s33 = sphi 0, %s37
      %p34 = scmp.ge.s32.totalorder %s33, 4
      %s41 = sphi 0, %s41
      %s43 = sphi 0, %s41
      %s44 = sphi 0, %s43
      %s58 = sphi 0, %s44
      %s62 = sphi 0, %s62
      %s64 = sphi 0, %s62
      %s65 = sphi 0, %s64
      %s79 = sphi 0, %s65
      %s83 = sphi 0, %s83
      %s85 = sphi 0, %s83
      %s86 = sphi 0, %s85
      %s100 = sphi 0, %s86
      %s104 = sphi 0, %s104
      %s106 = sphi 0, %s104
      %s107 = sphi 0, %s106
      %s121 = sphi 0, %s107
      %s125 = sphi 0, %s125
      %s127 = sphi 0, %s125
      %s128 = sphi 0, %s127
      %s142 = sphi 0, %s128
      %s148 = sphi 0, %s150
      %s151 = sphi 0, %s148
      %s152 = sphi 0, %s151
      %s168 = sphi 0, %s152
      %s174 = sphi 0, %s176
      %s177 = sphi 0, %s174
      %s178 = sphi 0, %s177
      %s194 = sphi 0, %s178
      %s200 = sphi 0, %s202
      %s203 = sphi 0, %s200
      %s204 = sphi 0, %s203
      %s220 = sphi 0, %s204
      %s226 = sphi 0, %s228
      %s229 = sphi 0, %s226
      %s230 = sphi 0, %s229
      %s246 = sphi 0, %s230
      %s252 = sphi 0, %s254
      %s255 = sphi 0, %s252
      %s256 = sphi 0, %s255
      %s272 = sphi 0, %s256
      %s278 = sphi 0, %s280
      %s281 = sphi 0, %s278
      %s282 = sphi 0, %s281
      %s298 = sphi 0, %s282
      %s304 = sphi 0, %s306
      %s307 = sphi 0, %s304
      %s308 = sphi 0, %s307
      %s324 = sphi 0, %s308
      %s330 = sphi 0, %s332
      %s333 = sphi 0, %s330
      %s334 = sphi 0, %s333
      %s350 = sphi 0, %s334
      %s356 = sphi 0, %s358
      %s359 = sphi 0, %s356
      %s360 = sphi 0, %s359
      %s376 = sphi 0, %s360
      %s382 = sphi 0, %s384
      %s385 = sphi 0, %s382
      %s386 = sphi 0, %s385
      %s402 = sphi 0, %s386
      %s408 = sphi 0, %s410
      %s411 = sphi 0, %s408
      %s412 = sphi 0, %s411
      %s428 = sphi 0, %s412
      %s434 = sphi 0, %s436
      %s437 = sphi 0, %s434
      %s438 = sphi 0, %s437
      %s454 = sphi 0, %s438
      %s458 = sphi 0, %s458
      %s460 = sphi 0, %s458
      %s461 = sphi 0, %s460
      %s475 = sphi 0, %s461
      %s479 = sphi 0, %s479
      %s481 = sphi 0, %s479
      %s482 = sphi 0, %s481
      %s496 = sphi 0, %s482
      %s500 = sphi 0, %s500
      %s502 = sphi 0, %s500
      %s503 = sphi 0, %s502
      %s517 = sphi 0, %s503
      %s521 = sphi 0, %s521
      %s523 = sphi 0, %s521
      %s524 = sphi 0, %s523
      %s538 = sphi 0, %s524
      %s542 = sphi 0, %s542
      %s544 = sphi 0, %s542
      %s545 = sphi 0, %s544
      %s559 = sphi 0, %s545
    $region4: #{tpu_custom_call.1} parent=1 // loop_header_branch
      %36 = sbr.rel (%p34) target = $region8
    $region5: #{tpu_custom_call.1} parent=1 // loop_body
      %s38 = ssub.s32 %s33, 1
      %s39 = ssub.s32 %s33, 2
      %s40 = sadd.s32 %s33, 1
      %s42 = sadd.s32 %s41, 1
      %p45 = scmp.eq.s32.totalorder %s33, 1
      %p46 = scmp.ne.s32.totalorder %s41, %s43
      %p47 = scmp.eq.s32.totalorder %s33, 0
      %p48 = por %p46, %p47
      %p49 = scmp.ne.s32.totalorder %s41, %s43
      %p50 = scmp.eq.s32.totalorder %s38, 1
      %p51 = por %p49, %p50
      %p52 = scmp.ne.s32.totalorder %s43, %s44
      %p53 = scmp.eq.s32.totalorder %s38, 0
      %p54 = por %p52, %p53
      %p55 = scmp.ne.s32.totalorder %s43, %s44
      %p56 = scmp.eq.s32.totalorder %s39, 1
      %p57 = por %p55, %p56
      %p59 = scmp.ne.s32.totalorder %s44, %s58
      %p60 = scmp.eq.s32.totalorder %s39, 0
      %p61 = por %p59, %p60
      %s63 = sadd.s32 %s62, 1
      %p66 = scmp.eq.s32.totalorder %s33, 1
      %p67 = scmp.ne.s32.totalorder %s62, %s64
      %p68 = scmp.eq.s32.totalorder %s33, 0
      %p69 = por %p67, %p68
      %p70 = scmp.ne.s32.totalorder %s62, %s64
      %p71 = scmp.eq.s32.totalorder %s38, 1
      %p72 = por %p70, %p71
      %p73 = scmp.ne.s32.totalorder %s64, %s65
      %p74 = scmp.eq.s32.totalorder %s38, 0
      %p75 = por %p73, %p74
      %p76 = scmp.ne.s32.totalorder %s64, %s65
      %p77 = scmp.eq.s32.totalorder %s39, 1
      %p78 = por %p76, %p77
      %p80 = scmp.ne.s32.totalorder %s65, %s79
      %p81 = scmp.eq.s32.totalorder %s39, 0
      %p82 = por %p80, %p81
      %s84 = sadd.s32 %s83, 1
      %p87 = scmp.eq.s32.totalorder %s33, 1
      %p88 = scmp.ne.s32.totalorder %s83, %s85
      %p89 = scmp.eq.s32.totalorder %s33, 0
      %p90 = por %p88, %p89
      %p91 = scmp.ne.s32.totalorder %s83, %s85
      %p92 = scmp.eq.s32.totalorder %s38, 1
      %p93 = por %p91, %p92
      %p94 = scmp.ne.s32.totalorder %s85, %s86
      %p95 = scmp.eq.s32.totalorder %s38, 0
      %p96 = por %p94, %p95
      %p97 = scmp.ne.s32.totalorder %s85, %s86
      %p98 = scmp.eq.s32.totalorder %s39, 1
      %p99 = por %p97, %p98
      %p101 = scmp.ne.s32.totalorder %s86, %s100
      %p102 = scmp.eq.s32.totalorder %s39, 0
      %p103 = por %p101, %p102
      %s105 = sadd.s32 %s104, 1
      %p108 = scmp.eq.s32.totalorder %s33, 1
      %p109 = scmp.ne.s32.totalorder %s104, %s106
      %p110 = scmp.eq.s32.totalorder %s33, 0
      %p111 = por %p109, %p110
      %p112 = scmp.ne.s32.totalorder %s104, %s106
      %p113 = scmp.eq.s32.totalorder %s38, 1
      %p114 = por %p112, %p113
      %p115 = scmp.ne.s32.totalorder %s106, %s107
      %p116 = scmp.eq.s32.totalorder %s38, 0
      %p117 = por %p115, %p116
      %p118 = scmp.ne.s32.totalorder %s106, %s107
      %p119 = scmp.eq.s32.totalorder %s39, 1
      %p120 = por %p118, %p119
      %p122 = scmp.ne.s32.totalorder %s107, %s121
      %p123 = scmp.eq.s32.totalorder %s39, 0
      %p124 = por %p122, %p123
      %s126 = sadd.s32 %s125, 1
      %p129 = scmp.eq.s32.totalorder %s33, 1
      %p130 = scmp.ne.s32.totalorder %s125, %s127
      %p131 = scmp.eq.s32.totalorder %s33, 0
      %p132 = por %p130, %p131
      %p133 = scmp.ne.s32.totalorder %s125, %s127
      %p134 = scmp.eq.s32.totalorder %s38, 1
      %p135 = por %p133, %p134
      %p136 = scmp.ne.s32.totalorder %s127, %s128
      %p137 = scmp.eq.s32.totalorder %s38, 0
      %p138 = por %p136, %p137
      %p139 = scmp.ne.s32.totalorder %s127, %s128
      %p140 = scmp.eq.s32.totalorder %s39, 1
      %p141 = por %p139, %p140
      %p143 = scmp.ne.s32.totalorder %s128, %s142
      %p144 = scmp.eq.s32.totalorder %s39, 0
      %p145 = por %p143, %p144
      %s146 = ssub.s32 %s33, %s40
      %p147 = scmp.eq.s32.totalorder %s146, 0
      %s149 = sadd.s32 %s148, 1
      %s150 = scalar_select %p147, %s148, %s149
      %p153 = pneg %p147
      %p154 = scmp.eq.s32.totalorder %s33, 1
      %p155 = por %p153, %p154
      %p156 = scmp.ne.s32.totalorder %s148, %s151
      %p157 = scmp.eq.s32.totalorder %s33, 0
      %p158 = por %p156, %p157
      %p159 = scmp.ne.s32.totalorder %s148, %s151
      %p160 = scmp.eq.s32.totalorder %s38, 1
      %p161 = por %p159, %p160
      %p162 = scmp.ne.s32.totalorder %s151, %s152
      %p163 = scmp.eq.s32.totalorder %s38, 0
      %p164 = por %p162, %p163
      %p165 = scmp.ne.s32.totalorder %s151, %s152
      %p166 = scmp.eq.s32.totalorder %s39, 1
      %p167 = por %p165, %p166
      %p169 = scmp.ne.s32.totalorder %s152, %s168
      %p170 = scmp.eq.s32.totalorder %s39, 0
      %p171 = por %p169, %p170
      %s172 = ssub.s32 %s33, %s40
      %p173 = scmp.eq.s32.totalorder %s172, 0
      %s175 = sadd.s32 %s174, 1
      %s176 = scalar_select %p173, %s174, %s175
      %p179 = pneg %p173
      %p180 = scmp.eq.s32.totalorder %s33, 1
      %p181 = por %p179, %p180
      %p182 = scmp.ne.s32.totalorder %s174, %s177
      %p183 = scmp.eq.s32.totalorder %s33, 0
      %p184 = por %p182, %p183
      %p185 = scmp.ne.s32.totalorder %s174, %s177
      %p186 = scmp.eq.s32.totalorder %s38, 1
      %p187 = por %p185, %p186
      %p188 = scmp.ne.s32.totalorder %s177, %s178
      %p189 = scmp.eq.s32.totalorder %s38, 0
      %p190 = por %p188, %p189
      %p191 = scmp.ne.s32.totalorder %s177, %s178
      %p192 = scmp.eq.s32.totalorder %s39, 1
      %p193 = por %p191, %p192
      %p195 = scmp.ne.s32.totalorder %s178, %s194
      %p196 = scmp.eq.s32.totalorder %s39, 0
      %p197 = por %p195, %p196
      %s198 = ssub.s32 %s33, %s40
      %p199 = scmp.eq.s32.totalorder %s198, 0
      %s201 = sadd.s32 %s200, 1
      %s202 = scalar_select %p199, %s200, %s201
      %p205 = pneg %p199
      %p206 = scmp.eq.s32.totalorder %s33, 1
      %p207 = por %p205, %p206
      %p208 = scmp.ne.s32.totalorder %s200, %s203
      %p209 = scmp.eq.s32.totalorder %s33, 0
      %p210 = por %p208, %p209
      %p211 = scmp.ne.s32.totalorder %s200, %s203
      %p212 = scmp.eq.s32.totalorder %s38, 1
      %p213 = por %p211, %p212
      %p214 = scmp.ne.s32.totalorder %s203, %s204
      %p215 = scmp.eq.s32.totalorder %s38, 0
      %p216 = por %p214, %p215
      %p217 = scmp.ne.s32.totalorder %s203, %s204
      %p218 = scmp.eq.s32.totalorder %s39, 1
      %p219 = por %p217, %p218
      %p221 = scmp.ne.s32.totalorder %s204, %s220
      %p222 = scmp.eq.s32.totalorder %s39, 0
      %p223 = por %p221, %p222
      %s224 = ssub.s32 %s33, %s40
      %p225 = scmp.eq.s32.totalorder %s224, 0
      %s227 = sadd.s32 %s226, 1
      %s228 = scalar_select %p225, %s226, %s227
      %p231 = pneg %p225
      %p232 = scmp.eq.s32.totalorder %s33, 1
      %p233 = por %p231, %p232
      %p234 = scmp.ne.s32.totalorder %s226, %s229
      %p235 = scmp.eq.s32.totalorder %s33, 0
      %p236 = por %p234, %p235
      %p237 = scmp.ne.s32.totalorder %s226, %s229
      %p238 = scmp.eq.s32.totalorder %s38, 1
      %p239 = por %p237, %p238
      %p240 = scmp.ne.s32.totalorder %s229, %s230
      %p241 = scmp.eq.s32.totalorder %s38, 0
      %p242 = por %p240, %p241
      %p243 = scmp.ne.s32.totalorder %s229, %s230
      %p244 = scmp.eq.s32.totalorder %s39, 1
      %p245 = por %p243, %p244
      %p247 = scmp.ne.s32.totalorder %s230, %s246
      %p248 = scmp.eq.s32.totalorder %s39, 0
      %p249 = por %p247, %p248
      %s250 = ssub.s32 %s33, %s40
      %p251 = scmp.eq.s32.totalorder %s250, 0
      %s253 = sadd.s32 %s252, 1
      %s254 = scalar_select %p251, %s252, %s253
      %p257 = pneg %p251
      %p258 = scmp.eq.s32.totalorder %s33, 1
      %p259 = por %p257, %p258
      %p260 = scmp.ne.s32.totalorder %s252, %s255
      %p261 = scmp.eq.s32.totalorder %s33, 0
      %p262 = por %p260, %p261
      %p263 = scmp.ne.s32.totalorder %s252, %s255
      %p264 = scmp.eq.s32.totalorder %s38, 1
      %p265 = por %p263, %p264
      %p266 = scmp.ne.s32.totalorder %s255, %s256
      %p267 = scmp.eq.s32.totalorder %s38, 0
      %p268 = por %p266, %p267
      %p269 = scmp.ne.s32.totalorder %s255, %s256
      %p270 = scmp.eq.s32.totalorder %s39, 1
      %p271 = por %p269, %p270
      %p273 = scmp.ne.s32.totalorder %s256, %s272
      %p274 = scmp.eq.s32.totalorder %s39, 0
      %p275 = por %p273, %p274
      %s276 = ssub.s32 %s33, %s40
      %p277 = scmp.eq.s32.totalorder %s276, 0
      %s279 = sadd.s32 %s278, 1
      %s280 = scalar_select %p277, %s278, %s279
      %p283 = pneg %p277
      %p284 = scmp.eq.s32.totalorder %s33, 1
      %p285 = por %p283, %p284
      %p286 = scmp.ne.s32.totalorder %s278, %s281
      %p287 = scmp.eq.s32.totalorder %s33, 0
      %p288 = por %p286, %p287
      %p289 = scmp.ne.s32.totalorder %s278, %s281
      %p290 = scmp.eq.s32.totalorder %s38, 1
      %p291 = por %p289, %p290
      %p292 = scmp.ne.s32.totalorder %s281, %s282
      %p293 = scmp.eq.s32.totalorder %s38, 0
      %p294 = por %p292, %p293
      %p295 = scmp.ne.s32.totalorder %s281, %s282
      %p296 = scmp.eq.s32.totalorder %s39, 1
      %p297 = por %p295, %p296
      %p299 = scmp.ne.s32.totalorder %s282, %s298
      %p300 = scmp.eq.s32.totalorder %s39, 0
      %p301 = por %p299, %p300
      %s302 = ssub.s32 %s33, %s40
      %p303 = scmp.eq.s32.totalorder %s302, 0
      %s305 = sadd.s32 %s304, 1
      %s306 = scalar_select %p303, %s304, %s305
      %p309 = pneg %p303
      %p310 = scmp.eq.s32.totalorder %s33, 1
      %p311 = por %p309, %p310
      %p312 = scmp.ne.s32.totalorder %s304, %s307
      %p313 = scmp.eq.s32.totalorder %s33, 0
      %p314 = por %p312, %p313
      %p315 = scmp.ne.s32.totalorder %s304, %s307
      %p316 = scmp.eq.s32.totalorder %s38, 1
      %p317 = por %p315, %p316
      %p318 = scmp.ne.s32.totalorder %s307, %s308
      %p319 = scmp.eq.s32.totalorder %s38, 0
      %p320 = por %p318, %p319
      %p321 = scmp.ne.s32.totalorder %s307, %s308
      %p322 = scmp.eq.s32.totalorder %s39, 1
      %p323 = por %p321, %p322
      %p325 = scmp.ne.s32.totalorder %s308, %s324
      %p326 = scmp.eq.s32.totalorder %s39, 0
      %p327 = por %p325, %p326
      %s328 = ssub.s32 %s33, %s40
      %p329 = scmp.eq.s32.totalorder %s328, 0
      %s331 = sadd.s32 %s330, 1
      %s332 = scalar_select %p329, %s330, %s331
      %p335 = pneg %p329
      %p336 = scmp.eq.s32.totalorder %s33, 1
      %p337 = por %p335, %p336
      %p338 = scmp.ne.s32.totalorder %s330, %s333
      %p339 = scmp.eq.s32.totalorder %s33, 0
      %p340 = por %p338, %p339
      %p341 = scmp.ne.s32.totalorder %s330, %s333
      %p342 = scmp.eq.s32.totalorder %s38, 1
      %p343 = por %p341, %p342
      %p344 = scmp.ne.s32.totalorder %s333, %s334
      %p345 = scmp.eq.s32.totalorder %s38, 0
      %p346 = por %p344, %p345
      %p347 = scmp.ne.s32.totalorder %s333, %s334
      %p348 = scmp.eq.s32.totalorder %s39, 1
      %p349 = por %p347, %p348
      %p351 = scmp.ne.s32.totalorder %s334, %s350
      %p352 = scmp.eq.s32.totalorder %s39, 0
      %p353 = por %p351, %p352
      %s354 = ssub.s32 %s33, %s40
      %p355 = scmp.eq.s32.totalorder %s354, 0
      %s357 = sadd.s32 %s356, 1
      %s358 = scalar_select %p355, %s356, %s357
      %p361 = pneg %p355
      %p362 = scmp.eq.s32.totalorder %s33, 1
      %p363 = por %p361, %p362
      %p364 = scmp.ne.s32.totalorder %s356, %s359
      %p365 = scmp.eq.s32.totalorder %s33, 0
      %p366 = por %p364, %p365
      %p367 = scmp.ne.s32.totalorder %s356, %s359
      %p368 = scmp.eq.s32.totalorder %s38, 1
      %p369 = por %p367, %p368
      %p370 = scmp.ne.s32.totalorder %s359, %s360
      %p371 = scmp.eq.s32.totalorder %s38, 0
      %p372 = por %p370, %p371
      %p373 = scmp.ne.s32.totalorder %s359, %s360
      %p374 = scmp.eq.s32.totalorder %s39, 1
      %p375 = por %p373, %p374
      %p377 = scmp.ne.s32.totalorder %s360, %s376
      %p378 = scmp.eq.s32.totalorder %s39, 0
      %p379 = por %p377, %p378
      %s380 = ssub.s32 %s33, %s40
      %p381 = scmp.eq.s32.totalorder %s380, 0
      %s383 = sadd.s32 %s382, 1
      %s384 = scalar_select %p381, %s382, %s383
      %p387 = pneg %p381
      %p388 = scmp.eq.s32.totalorder %s33, 1
      %p389 = por %p387, %p388
      %p390 = scmp.ne.s32.totalorder %s382, %s385
      %p391 = scmp.eq.s32.totalorder %s33, 0
      %p392 = por %p390, %p391
      %p393 = scmp.ne.s32.totalorder %s382, %s385
      %p394 = scmp.eq.s32.totalorder %s38, 1
      %p395 = por %p393, %p394
      %p396 = scmp.ne.s32.totalorder %s385, %s386
      %p397 = scmp.eq.s32.totalorder %s38, 0
      %p398 = por %p396, %p397
      %p399 = scmp.ne.s32.totalorder %s385, %s386
      %p400 = scmp.eq.s32.totalorder %s39, 1
      %p401 = por %p399, %p400
      %p403 = scmp.ne.s32.totalorder %s386, %s402
      %p404 = scmp.eq.s32.totalorder %s39, 0
      %p405 = por %p403, %p404
      %s406 = ssub.s32 %s33, %s40
      %p407 = scmp.eq.s32.totalorder %s406, 0
      %s409 = sadd.s32 %s408, 1
      %s410 = scalar_select %p407, %s408, %s409
      %p413 = pneg %p407
      %p414 = scmp.eq.s32.totalorder %s33, 1
      %p415 = por %p413, %p414
      %p416 = scmp.ne.s32.totalorder %s408, %s411
      %p417 = scmp.eq.s32.totalorder %s33, 0
      %p418 = por %p416, %p417
      %p419 = scmp.ne.s32.totalorder %s408, %s411
      %p420 = scmp.eq.s32.totalorder %s38, 1
      %p421 = por %p419, %p420
      %p422 = scmp.ne.s32.totalorder %s411, %s412
      %p423 = scmp.eq.s32.totalorder %s38, 0
      %p424 = por %p422, %p423
      %p425 = scmp.ne.s32.totalorder %s411, %s412
      %p426 = scmp.eq.s32.totalorder %s39, 1
      %p427 = por %p425, %p426
      %p429 = scmp.ne.s32.totalorder %s412, %s428
      %p430 = scmp.eq.s32.totalorder %s39, 0
      %p431 = por %p429, %p430
      %s432 = ssub.s32 %s33, %s40
      %p433 = scmp.eq.s32.totalorder %s432, 0
      %s435 = sadd.s32 %s434, 1
      %s436 = scalar_select %p433, %s434, %s435
      %p439 = pneg %p433
      %p440 = scmp.eq.s32.totalorder %s33, 1
      %p441 = por %p439, %p440
      %p442 = scmp.ne.s32.totalorder %s434, %s437
      %p443 = scmp.eq.s32.totalorder %s33, 0
      %p444 = por %p442, %p443
      %p445 = scmp.ne.s32.totalorder %s434, %s437
      %p446 = scmp.eq.s32.totalorder %s38, 1
      %p447 = por %p445, %p446
      %p448 = scmp.ne.s32.totalorder %s437, %s438
      %p449 = scmp.eq.s32.totalorder %s38, 0
      %p450 = por %p448, %p449
      %p451 = scmp.ne.s32.totalorder %s437, %s438
      %p452 = scmp.eq.s32.totalorder %s39, 1
      %p453 = por %p451, %p452
      %p455 = scmp.ne.s32.totalorder %s438, %s454
      %p456 = scmp.eq.s32.totalorder %s39, 0
      %p457 = por %p455, %p456
      %s459 = sadd.s32 %s458, 1
      %p462 = scmp.eq.s32.totalorder %s33, 1
      %p463 = scmp.ne.s32.totalorder %s458, %s460
      %p464 = scmp.eq.s32.totalorder %s33, 0
      %p465 = por %p463, %p464
      %p466 = scmp.ne.s32.totalorder %s458, %s460
      %p467 = scmp.eq.s32.totalorder %s38, 1
      %p468 = por %p466, %p467
      %p469 = scmp.ne.s32.totalorder %s460, %s461
      %p470 = scmp.eq.s32.totalorder %s38, 0
      %p471 = por %p469, %p470
      %p472 = scmp.ne.s32.totalorder %s460, %s461
      %p473 = scmp.eq.s32.totalorder %s39, 1
      %p474 = por %p472, %p473
      %p476 = scmp.ne.s32.totalorder %s461, %s475
      %p477 = scmp.eq.s32.totalorder %s39, 0
      %p478 = por %p476, %p477
      %s480 = sadd.s32 %s479, 1
      %p483 = scmp.eq.s32.totalorder %s33, 1
      %p484 = scmp.ne.s32.totalorder %s479, %s481
      %p485 = scmp.eq.s32.totalorder %s33, 0
      %p486 = por %p484, %p485
      %p487 = scmp.ne.s32.totalorder %s479, %s481
      %p488 = scmp.eq.s32.totalorder %s38, 1
      %p489 = por %p487, %p488
      %p490 = scmp.ne.s32.totalorder %s481, %s482
      %p491 = scmp.eq.s32.totalorder %s38, 0
      %p492 = por %p490, %p491
      %p493 = scmp.ne.s32.totalorder %s481, %s482
      %p494 = scmp.eq.s32.totalorder %s39, 1
      %p495 = por %p493, %p494
      %p497 = scmp.ne.s32.totalorder %s482, %s496
      %p498 = scmp.eq.s32.totalorder %s39, 0
      %p499 = por %p497, %p498
      %s501 = sadd.s32 %s500, 1
      %p504 = scmp.eq.s32.totalorder %s33, 1
      %p505 = scmp.ne.s32.totalorder %s500, %s502
      %p506 = scmp.eq.s32.totalorder %s33, 0
      %p507 = por %p505, %p506
      %p508 = scmp.ne.s32.totalorder %s500, %s502
      %p509 = scmp.eq.s32.totalorder %s38, 1
      %p510 = por %p508, %p509
      %p511 = scmp.ne.s32.totalorder %s502, %s503
      %p512 = scmp.eq.s32.totalorder %s38, 0
      %p513 = por %p511, %p512
      %p514 = scmp.ne.s32.totalorder %s502, %s503
      %p515 = scmp.eq.s32.totalorder %s39, 1
      %p516 = por %p514, %p515
      %p518 = scmp.ne.s32.totalorder %s503, %s517
      %p519 = scmp.eq.s32.totalorder %s39, 0
      %p520 = por %p518, %p519
      %s522 = sadd.s32 %s521, 1
      %p525 = scmp.eq.s32.totalorder %s33, 1
      %p526 = scmp.ne.s32.totalorder %s521, %s523
      %p527 = scmp.eq.s32.totalorder %s33, 0
      %p528 = por %p526, %p527
      %p529 = scmp.ne.s32.totalorder %s521, %s523
      %p530 = scmp.eq.s32.totalorder %s38, 1
      %p531 = por %p529, %p530
      %p532 = scmp.ne.s32.totalorder %s523, %s524
      %p533 = scmp.eq.s32.totalorder %s38, 0
      %p534 = por %p532, %p533
      %p535 = scmp.ne.s32.totalorder %s523, %s524
      %p536 = scmp.eq.s32.totalorder %s39, 1
      %p537 = por %p535, %p536
      %p539 = scmp.ne.s32.totalorder %s524, %s538
      %p540 = scmp.eq.s32.totalorder %s39, 0
      %p541 = por %p539, %p540
      %s543 = sadd.s32 %s542, 1
      %p546 = scmp.eq.s32.totalorder %s33, 1
      %p547 = scmp.ne.s32.totalorder %s542, %s544
      %p548 = scmp.eq.s32.totalorder %s33, 0
      %p549 = por %p547, %p548
      %p550 = scmp.ne.s32.totalorder %s542, %s544
      %p551 = scmp.eq.s32.totalorder %s38, 1
      %p552 = por %p550, %p551
      %p553 = scmp.ne.s32.totalorder %s544, %s545
      %p554 = scmp.eq.s32.totalorder %s38, 0
      %p555 = por %p553, %p554
      %p556 = scmp.ne.s32.totalorder %s544, %s545
      %p557 = scmp.eq.s32.totalorder %s39, 1
      %p558 = por %p556, %p557
      %p560 = scmp.ne.s32.totalorder %s545, %s559
      %p561 = scmp.eq.s32.totalorder %s39, 0
      %p562 = por %p560, %p561
      %p563 = scmp.le.s32.totalorder 1, %s33
      %p564 = scmp.lt.s32.totalorder %s33, 3
      %p565 = pnand %p563, %p564
      %p566 = pneg %p565
      // Predicated region
      $region9: #{tpu_custom_call.1} parent=5 // pred_check
        _
      $region10: #{tpu_custom_call.1} parent=5 // pred_check_branch
        %568 = sbr.rel (%p565) target = $region12
      $region11: #{tpu_custom_call.1} parent=5 // pred_region
        %s569 = ssub.s32 %s33, 1
        // Predicated region
        $region13: #{tpu_custom_call.1} parent=11 // pred_check
          %p570 = pneg %p54
        $region14: #{tpu_custom_call.1} parent=11 // pred_check_branch
          %572 = sbr.rel (%p570) target = $region16
        $region15: #{tpu_custom_call.1} parent=11 // pred_region
          %s574 = ssub.s32 256, 256
          %575 = vsyncadd [#allocation5], %s574
          %s576 = sshll.u32 [#allocation4], 4
          %s577 = int_to_ptr.vmem [resolvable:$true] %s576
          %582 = dma.hbm_to_vmem [thread:$0]  %s0, 256, %s577, [#allocation5], 128, 128, 8
        $region16: #{tpu_custom_call.1} parent=11 // pred_fallthru
          _
        // Predicated region
        $region17: #{tpu_custom_call.1} parent=11 // pred_check
          %p583 = pneg %p75
        $region18: #{tpu_custom_call.1} parent=11 // pred_check_branch
          %585 = sbr.rel (%p583) target = $region20
        $region19: #{tpu_custom_call.1} parent=11 // pred_region
          _
        $region20: #{tpu_custom_call.1} parent=11 // pred_fallthru
          _
        // Predicated region
        $region21: #{tpu_custom_call.1} parent=11 // pred_check
          %p586 = pneg %p96
        $region22: #{tpu_custom_call.1} parent=11 // pred_check_branch
          %588 = sbr.rel (%p586) target = $region24
        $region23: #{tpu_custom_call.1} parent=11 // pred_region
          %s590 = ssub.s32 16, 16
          %591 = vsyncadd [#allocation8], %s590
          %s593 = sshll.u32 [#allocation7], 4
          %s594 = int_to_ptr.vmem [resolvable:$true] %s593
          %596 = dma.hbm_to_vmem [thread:$0]  %s2, 16, %s594, [#allocation8]
        $region24: #{tpu_custom_call.1} parent=11 // pred_fallthru
          _
        // Predicated region
        $region25: #{tpu_custom_call.1} parent=11 // pred_check
          %p597 = pneg %p117
        $region26: #{tpu_custom_call.1} parent=11 // pred_check_branch
          %599 = sbr.rel (%p597) target = $region28
        $region27: #{tpu_custom_call.1} parent=11 // pred_region
          %s601 = ssub.s32 16, 16
          %602 = vsyncadd [#allocation8], %s601
          %s604 = sshll.u32 [#allocation9], 4
          %s605 = int_to_ptr.vmem [resolvable:$true] %s604
          %607 = dma.hbm_to_vmem [thread:$0]  %s3, 16, %s605, [#allocation8]
        $region28: #{tpu_custom_call.1} parent=11 // pred_fallthru
          _
        // Predicated region
        $region29: #{tpu_custom_call.1} parent=11 // pred_check
          %p608 = pneg %p138
        $region30: #{tpu_custom_call.1} parent=11 // pred_check_branch
          %610 = sbr.rel (%p608) target = $region32
        $region31: #{tpu_custom_call.1} parent=11 // pred_region
          %s612 = ssub.s32 16, 16
          %613 = vsyncadd [#allocation11], %s612
          %s615 = sshll.u32 [#allocation10], 4
          %s616 = int_to_ptr.vmem [resolvable:$true] %s615
          %618 = dma.hbm_to_vmem [thread:$0]  %s4, 16, %s616, [#allocation11]
        $region32: #{tpu_custom_call.1} parent=11 // pred_fallthru
          _
        // Predicated region
        $region33: #{tpu_custom_call.1} parent=11 // pred_check
          %p619 = pneg %p471
        $region34: #{tpu_custom_call.1} parent=11 // pred_check_branch
          %621 = sbr.rel (%p619) target = $region36
        $region35: #{tpu_custom_call.1} parent=11 // pred_region
          _
        $region36: #{tpu_custom_call.1} parent=11 // pred_fallthru
          _
        // Predicated region
        $region37: #{tpu_custom_call.1} parent=11 // pred_check
          %p622 = pneg %p492
        $region38: #{tpu_custom_call.1} parent=11 // pred_check_branch
          %624 = sbr.rel (%p622) target = $region40
        $region39: #{tpu_custom_call.1} parent=11 // pred_region
          _
        $region40: #{tpu_custom_call.1} parent=11 // pred_fallthru
          _
        // Predicated region
        $region41: #{tpu_custom_call.1} parent=11 // pred_check
          %p625 = pneg %p513
        $region42: #{tpu_custom_call.1} parent=11 // pred_check_branch
          %627 = sbr.rel (%p625) target = $region44
        $region43: #{tpu_custom_call.1} parent=11 // pred_region
          _
        $region44: #{tpu_custom_call.1} parent=11 // pred_fallthru
          _
      $region12: #{tpu_custom_call.1} parent=5 // pred_fallthru
        _
      %p628 = scmp.lt.s32.totalorder %s33, 2
      // Predicated region
      $region45: #{tpu_custom_call.1} parent=5 // pred_check
        %p629 = pneg %p628
      $region46: #{tpu_custom_call.1} parent=5 // pred_check_branch
        %631 = sbr.rel (%p629) target = $region48
      $region47: #{tpu_custom_call.1} parent=5 // pred_region
        // Predicated region
        $region49: #{tpu_custom_call.1} parent=47 // pred_check
          %p632 = pneg %p158
        $region50: #{tpu_custom_call.1} parent=47 // pred_check_branch
          %634 = sbr.rel (%p632) target = $region52
        $region51: #{tpu_custom_call.1} parent=47 // pred_region
          %p635 = scmp.lt.s32.totalorder %s33, 1
          %s636 = scalar_select %p635, %s33, 1
          %s637 = smul.addr %s636, 4
          %s638 = smul.addr %s637, 4
          %s639 = scalar_lea.vmem %s5, %s638
        $region52: #{tpu_custom_call.1} parent=47 // pred_fallthru
          _
        // Predicated region
        $region53: #{tpu_custom_call.1} parent=47 // pred_check
          %p640 = pneg %p184
        $region54: #{tpu_custom_call.1} parent=47 // pred_check_branch
          %642 = sbr.rel (%p640) target = $region56
        $region55: #{tpu_custom_call.1} parent=47 // pred_region
          %s643 = sand.u32 %s33, 1
          %s644 = scalar_lea.sflag [#allocation5], %s643
          %s645 = sand.u32 %s174, 1
          %s646 = scalar_lea.vmem [#allocation12], %s645
          %s648 = ssub.s32 16, 16
          %649 = vsyncadd %s644, %s648
          %s650 = smul.addr %s33, 16
          %s651 = scalar_lea.hbm %s6, %s650
          %s653 = sshll.u32 %s646, 4
          %s654 = int_to_ptr.vmem [resolvable:$true] %s653
          %656 = dma.hbm_to_vmem [thread:$0]  %s651, 16, %s654, %s644
        $region56: #{tpu_custom_call.1} parent=47 // pred_fallthru
          _
        // Predicated region
        $region57: #{tpu_custom_call.1} parent=47 // pred_check
          %p657 = pneg %p210
        $region58: #{tpu_custom_call.1} parent=47 // pred_check_branch
          %659 = sbr.rel (%p657) target = $region60
        $region59: #{tpu_custom_call.1} parent=47 // pred_region
          %p660 = scmp.lt.s32.totalorder %s33, 1
          %s661 = scalar_select %p660, %s33, 1
          %s662 = smul.addr %s661, 4
          %s663 = smul.addr %s662, 4
          %s664 = scalar_lea.vmem %s7, %s663
        $region60: #{tpu_custom_call.1} parent=47 // pred_fallthru
          _
        // Predicated region
        $region61: #{tpu_custom_call.1} parent=47 // pred_check
          %p665 = pneg %p236
        $region62: #{tpu_custom_call.1} parent=47 // pred_check_branch
          %667 = sbr.rel (%p665) target = $region64
        $region63: #{tpu_custom_call.1} parent=47 // pred_region
          %s668 = sand.u32 %s33, 1
          %s669 = scalar_lea.sflag [#allocation5], %s668
          %s670 = sand.u32 %s226, 1
          %s671 = scalar_lea.vmem [#allocation13], %s670
          %s673 = ssub.s32 16, 16
          %674 = vsyncadd %s669, %s673
          %s675 = smul.addr %s33, 16
          %s676 = scalar_lea.hbm %s8, %s675
          %s678 = sshll.u32 %s671, 4
          %s679 = int_to_ptr.vmem [resolvable:$true] %s678
          %681 = dma.hbm_to_vmem [thread:$0]  %s676, 16, %s679, %s669
        $region64: #{tpu_custom_call.1} parent=47 // pred_fallthru
          _
        // Predicated region
        $region65: #{tpu_custom_call.1} parent=47 // pred_check
          %p682 = pneg %p262
        $region66: #{tpu_custom_call.1} parent=47 // pred_check_branch
          %684 = sbr.rel (%p682) target = $region68
        $region67: #{tpu_custom_call.1} parent=47 // pred_region
          %s685 = sand.u32 %s33, 1
          %s686 = scalar_lea.sflag [#allocation5], %s685
          %s687 = sand.u32 %s252, 1
          %s688 = scalar_lea.vmem [#allocation14], %s687
          %s690 = ssub.s32 16, 16
          %691 = vsyncadd %s686, %s690
          %s692 = smul.addr %s33, 16
          %s693 = scalar_lea.hbm %s9, %s692
          %s695 = sshll.u32 %s688, 4
          %s696 = int_to_ptr.vmem [resolvable:$true] %s695
          %698 = dma.hbm_to_vmem [thread:$0]  %s693, 16, %s696, %s686
        $region68: #{tpu_custom_call.1} parent=47 // pred_fallthru
          _
        // Predicated region
        $region69: #{tpu_custom_call.1} parent=47 // pred_check
          %p699 = pneg %p288
        $region70: #{tpu_custom_call.1} parent=47 // pred_check_branch
          %701 = sbr.rel (%p699) target = $region72
        $region71: #{tpu_custom_call.1} parent=47 // pred_region
          %s702 = sand.u32 %s33, 1
          %s703 = scalar_lea.sflag [#allocation5], %s702
          %s704 = sand.u32 %s278, 1
          %s705 = scalar_lea.vmem [#allocation15], %s704
          %s707 = ssub.s32 16, 16
          %708 = vsyncadd %s703, %s707
          %s709 = smul.addr %s33, 16
          %s710 = scalar_lea.hbm %s10, %s709
          %s712 = sshll.u32 %s705, 4
          %s713 = int_to_ptr.vmem [resolvable:$true] %s712
          %715 = dma.hbm_to_vmem [thread:$0]  %s710, 16, %s713, %s703
        $region72: #{tpu_custom_call.1} parent=47 // pred_fallthru
          _
        // Predicated region
        $region73: #{tpu_custom_call.1} parent=47 // pred_check
          %p716 = pneg %p314
        $region74: #{tpu_custom_call.1} parent=47 // pred_check_branch
          %718 = sbr.rel (%p716) target = $region76
        $region75: #{tpu_custom_call.1} parent=47 // pred_region
          %p719 = scmp.lt.s32.totalorder %s33, 1
          %s720 = scalar_select %p719, %s33, 1
          %s721 = smul.addr %s720, 4
          %s722 = smul.addr %s721, 4
          %s723 = scalar_lea.vmem %s11, %s722
        $region76: #{tpu_custom_call.1} parent=47 // pred_fallthru
          _
        // Predicated region
        $region77: #{tpu_custom_call.1} parent=47 // pred_check
          %p724 = pneg %p340
        $region78: #{tpu_custom_call.1} parent=47 // pred_check_branch
          %726 = sbr.rel (%p724) target = $region80
        $region79: #{tpu_custom_call.1} parent=47 // pred_region
          %s727 = sand.u32 %s33, 1
          %s728 = scalar_lea.sflag [#allocation5], %s727
          %s729 = sand.u32 %s330, 1
          %s730 = scalar_lea.vmem [#allocation16], %s729
          %s732 = ssub.s32 16, 16
          %733 = vsyncadd %s728, %s732
          %s734 = smul.addr %s33, 16
          %s735 = scalar_lea.hbm %s12, %s734
          %s737 = sshll.u32 %s730, 4
          %s738 = int_to_ptr.vmem [resolvable:$true] %s737
          %740 = dma.hbm_to_vmem [thread:$0]  %s735, 16, %s738, %s728
        $region80: #{tpu_custom_call.1} parent=47 // pred_fallthru
          _
        // Predicated region
        $region81: #{tpu_custom_call.1} parent=47 // pred_check
          %p741 = pneg %p366
        $region82: #{tpu_custom_call.1} parent=47 // pred_check_branch
          %743 = sbr.rel (%p741) target = $region84
        $region83: #{tpu_custom_call.1} parent=47 // pred_region
          %p744 = scmp.lt.s32.totalorder %s33, 1
          %s745 = scalar_select %p744, %s33, 1
          %s746 = smul.addr %s745, 8
          %s747 = smul.addr %s746, 4
          %s748 = scalar_lea.vmem %s13, %s747
        $region84: #{tpu_custom_call.1} parent=47 // pred_fallthru
          _
        // Predicated region
        $region85: #{tpu_custom_call.1} parent=47 // pred_check
          %p749 = pneg %p392
        $region86: #{tpu_custom_call.1} parent=47 // pred_check_branch
          %751 = sbr.rel (%p749) target = $region88
        $region87: #{tpu_custom_call.1} parent=47 // pred_region
          %s752 = sand.u32 %s33, 1
          %s753 = scalar_lea.sflag [#allocation5], %s752
          %s754 = sand.u32 %s382, 1
          %s755 = scalar_lea.vmem [#allocation17], %s754
          %s757 = ssub.s32 16, 16
          %758 = vsyncadd %s753, %s757
          %s759 = smul.addr %s33, 16
          %s760 = scalar_lea.hbm %s14, %s759
          %s762 = sshll.u32 %s755, 4
          %s763 = int_to_ptr.vmem [resolvable:$true] %s762
          %765 = dma.hbm_to_vmem [thread:$0]  %s760, 16, %s763, %s753
        $region88: #{tpu_custom_call.1} parent=47 // pred_fallthru
          _
        // Predicated region
        $region89: #{tpu_custom_call.1} parent=47 // pred_check
          %p766 = pneg %p418
        $region90: #{tpu_custom_call.1} parent=47 // pred_check_branch
          %768 = sbr.rel (%p766) target = $region92
        $region91: #{tpu_custom_call.1} parent=47 // pred_region
          %s769 = sand.u32 %s33, 1
          %s770 = scalar_lea.sflag [#allocation5], %s769
          %s771 = sand.u32 %s408, 1
          %s772 = scalar_lea.vmem [#allocation18], %s771
          %s774 = ssub.s32 16, 16
          %775 = vsyncadd %s770, %s774
          %s776 = smul.addr %s33, 16
          %s777 = scalar_lea.hbm %s15, %s776
          %s779 = sshll.u32 %s772, 4
          %s780 = int_to_ptr.vmem [resolvable:$true] %s779
          %782 = dma.hbm_to_vmem [thread:$0]  %s777, 16, %s780, %s770
        $region92: #{tpu_custom_call.1} parent=47 // pred_fallthru
          _
        // Predicated region
        $region93: #{tpu_custom_call.1} parent=47 // pred_check
          %p783 = pneg %p444
        $region94: #{tpu_custom_call.1} parent=47 // pred_check_branch
          %785 = sbr.rel (%p783) target = $region96
        $region95: #{tpu_custom_call.1} parent=47 // pred_region
          %s786 = sand.u32 %s33, 1
          %s787 = scalar_lea.sflag [#allocation5], %s786
          %s788 = sand.u32 %s434, 1
          %s789 = scalar_lea.vmem [#allocation19], %s788
          %s791 = ssub.s32 16, 16
          %792 = vsyncadd %s787, %s791
          %s793 = smul.addr %s33, 16
          %s794 = scalar_lea.hbm %s16, %s793
          %s796 = sshll.u32 %s789, 4
          %s797 = int_to_ptr.vmem [resolvable:$true] %s796
          %799 = dma.hbm_to_vmem [thread:$0]  %s794, 16, %s797, %s787
        $region96: #{tpu_custom_call.1} parent=47 // pred_fallthru
          _
      $region48: #{tpu_custom_call.1} parent=5 // pred_fallthru
        _
      %p800 = scmp.le.s32.totalorder 1, %s33
      %p801 = scmp.lt.s32.totalorder %s33, 3
      %p802 = pnand %p800, %p801
      %p803 = pneg %p802
      // Predicated region
      $region97: #{tpu_custom_call.1} parent=5 // pred_check
        _
      $region98: #{tpu_custom_call.1} parent=5 // pred_check_branch
        %805 = sbr.rel (%p802) target = $region100
      $region99: #{tpu_custom_call.1} parent=5 // pred_region
        %s806 = ssub.s32 %s33, 1
        // Predicated region
        $region101: #{tpu_custom_call.1} parent=99 // pred_check
          %p807 = pneg %p54
        $region102: #{tpu_custom_call.1} parent=99 // pred_check_branch
          %809 = sbr.rel (%p807) target = $region104
        $region103: #{tpu_custom_call.1} parent=99 // pred_region
          %810 = dma.done [#allocation5], 256
        $region104: #{tpu_custom_call.1} parent=99 // pred_fallthru
          _
        // Predicated region
        $region105: #{tpu_custom_call.1} parent=99 // pred_check
          %p811 = pneg %p96
        $region106: #{tpu_custom_call.1} parent=99 // pred_check_branch
          %813 = sbr.rel (%p811) target = $region108
        $region107: #{tpu_custom_call.1} parent=99 // pred_region
          %814 = dma.done [#allocation8], 16
        $region108: #{tpu_custom_call.1} parent=99 // pred_fallthru
          _
        // Predicated region
        $region109: #{tpu_custom_call.1} parent=99 // pred_check
          %p815 = pneg %p117
        $region110: #{tpu_custom_call.1} parent=99 // pred_check_branch
          %817 = sbr.rel (%p815) target = $region112
        $region111: #{tpu_custom_call.1} parent=99 // pred_region
          %818 = dma.done [#allocation8], 16
        $region112: #{tpu_custom_call.1} parent=99 // pred_fallthru
          _
        // Predicated region
        $region113: #{tpu_custom_call.1} parent=99 // pred_check
          %p819 = pneg %p138
        $region114: #{tpu_custom_call.1} parent=99 // pred_check_branch
          %821 = sbr.rel (%p819) target = $region116
        $region115: #{tpu_custom_call.1} parent=99 // pred_region
          %822 = dma.done [#allocation11], 16
        $region116: #{tpu_custom_call.1} parent=99 // pred_fallthru
          _
        %s823 = sand.u32 %s38, 1
        %s824 = scalar_lea.sflag [#allocation5], %s823
        %s825 = sand.u32 %s177, 1
        %s826 = scalar_lea.vmem [#allocation12], %s825
        // Predicated region
        $region117: #{tpu_custom_call.1} parent=99 // pred_check
          %p827 = pneg %p190
        $region118: #{tpu_custom_call.1} parent=99 // pred_check_branch
          %829 = sbr.rel (%p827) target = $region120
        $region119: #{tpu_custom_call.1} parent=99 // pred_region
          %830 = dma.done %s824, 16
        $region120: #{tpu_custom_call.1} parent=99 // pred_fallthru
          _
        %s831 = sand.u32 %s38, 1
        %s832 = scalar_lea.sflag [#allocation5], %s831
        %s833 = sand.u32 %s229, 1
        %s834 = scalar_lea.vmem [#allocation13], %s833
        // Predicated region
        $region121: #{tpu_custom_call.1} parent=99 // pred_check
          %p835 = pneg %p242
        $region122: #{tpu_custom_call.1} parent=99 // pred_check_branch
          %837 = sbr.rel (%p835) target = $region124
        $region123: #{tpu_custom_call.1} parent=99 // pred_region
          %838 = dma.done %s832, 16
        $region124: #{tpu_custom_call.1} parent=99 // pred_fallthru
          _
        %s839 = sand.u32 %s38, 1
        %s840 = scalar_lea.sflag [#allocation5], %s839
        %s841 = sand.u32 %s255, 1
        %s842 = scalar_lea.vmem [#allocation14], %s841
        // Predicated region
        $region125: #{tpu_custom_call.1} parent=99 // pred_check
          %p843 = pneg %p268
        $region126: #{tpu_custom_call.1} parent=99 // pred_check_branch
          %845 = sbr.rel (%p843) target = $region128
        $region127: #{tpu_custom_call.1} parent=99 // pred_region
          %846 = dma.done %s840, 16
        $region128: #{tpu_custom_call.1} parent=99 // pred_fallthru
          _
        %s847 = sand.u32 %s38, 1
        %s848 = scalar_lea.sflag [#allocation5], %s847
        %s849 = sand.u32 %s281, 1
        %s850 = scalar_lea.vmem [#allocation15], %s849
        // Predicated region
        $region129: #{tpu_custom_call.1} parent=99 // pred_check
          %p851 = pneg %p294
        $region130: #{tpu_custom_call.1} parent=99 // pred_check_branch
          %853 = sbr.rel (%p851) target = $region132
        $region131: #{tpu_custom_call.1} parent=99 // pred_region
          %854 = dma.done %s848, 16
        $region132: #{tpu_custom_call.1} parent=99 // pred_fallthru
          _
        %s855 = sand.u32 %s38, 1
        %s856 = scalar_lea.sflag [#allocation5], %s855
        %s857 = sand.u32 %s333, 1
        %s858 = scalar_lea.vmem [#allocation16], %s857
        // Predicated region
        $region133: #{tpu_custom_call.1} parent=99 // pred_check
          %p859 = pneg %p346
        $region134: #{tpu_custom_call.1} parent=99 // pred_check_branch
          %861 = sbr.rel (%p859) target = $region136
        $region135: #{tpu_custom_call.1} parent=99 // pred_region
          %862 = dma.done %s856, 16
        $region136: #{tpu_custom_call.1} parent=99 // pred_fallthru
          _
        %s863 = sand.u32 %s38, 1
        %s864 = scalar_lea.sflag [#allocation5], %s863
        %s865 = sand.u32 %s385, 1
        %s866 = scalar_lea.vmem [#allocation17], %s865
        // Predicated region
        $region137: #{tpu_custom_call.1} parent=99 // pred_check
          %p867 = pneg %p398
        $region138: #{tpu_custom_call.1} parent=99 // pred_check_branch
          %869 = sbr.rel (%p867) target = $region140
        $region139: #{tpu_custom_call.1} parent=99 // pred_region
          %870 = dma.done %s864, 16
        $region140: #{tpu_custom_call.1} parent=99 // pred_fallthru
          _
        %s871 = sand.u32 %s38, 1
        %s872 = scalar_lea.sflag [#allocation5], %s871
        %s873 = sand.u32 %s411, 1
        %s874 = scalar_lea.vmem [#allocation18], %s873
        // Predicated region
        $region141: #{tpu_custom_call.1} parent=99 // pred_check
          %p875 = pneg %p424
        $region142: #{tpu_custom_call.1} parent=99 // pred_check_branch
          %877 = sbr.rel (%p875) target = $region144
        $region143: #{tpu_custom_call.1} parent=99 // pred_region
          %878 = dma.done %s872, 16
        $region144: #{tpu_custom_call.1} parent=99 // pred_fallthru
          _
        %s879 = sand.u32 %s38, 1
        %s880 = scalar_lea.sflag [#allocation5], %s879
        %s881 = sand.u32 %s437, 1
        %s882 = scalar_lea.vmem [#allocation19], %s881
        // Predicated region
        $region145: #{tpu_custom_call.1} parent=99 // pred_check
          %p883 = pneg %p450
        $region146: #{tpu_custom_call.1} parent=99 // pred_check_branch
          %885 = sbr.rel (%p883) target = $region148
        $region147: #{tpu_custom_call.1} parent=99 // pred_region
          %886 = dma.done %s880, 16
        $region148: #{tpu_custom_call.1} parent=99 // pred_fallthru
          _
        %p887 = pneg %p54
        %p888 = pneg %p51
        %p889 = pneg %p75
        %p890 = pneg %p72
        %p891 = pneg %p96
        %p892 = pneg %p93
        %p893 = pneg %p117
        %p894 = pneg %p114
        %p895 = pneg %p138
        %p896 = pneg %p135
        %p897 = scmp.lt.s32.totalorder %s38, 1
        %s898 = scalar_select %p897, %s38, 1
        %s899 = smul.addr %s898, 4
        %s900 = smul.addr %s899, 4
        %s901 = scalar_lea.vmem %s5, %s900
        %p902 = pneg %p164
        %p903 = pneg %p161
        %s904 = sand.u32 %s38, 1
        %s905 = scalar_lea.sflag [#allocation5], %s904
        %s906 = sand.u32 %s177, 1
        %s907 = scalar_lea.vmem [#allocation12], %s906
        %p908 = pneg %p190
        %p909 = pneg %p187
        %p910 = scmp.lt.s32.totalorder %s38, 1
        %s911 = scalar_select %p910, %s38, 1
        %s912 = smul.addr %s911, 4
        %s913 = smul.addr %s912, 4
        %s914 = scalar_lea.vmem %s7, %s913
        %p915 = pneg %p216
        %p916 = pneg %p213
        %s917 = sand.u32 %s38, 1
        %s918 = scalar_lea.sflag [#allocation5], %s917
        %s919 = sand.u32 %s229, 1
        %s920 = scalar_lea.vmem [#allocation13], %s919
        %p921 = pneg %p242
        %p922 = pneg %p239
        %s923 = sand.u32 %s38, 1
        %s924 = scalar_lea.sflag [#allocation5], %s923
        %s925 = sand.u32 %s255, 1
        %s926 = scalar_lea.vmem [#allocation14], %s925
        %p927 = pneg %p268
        %p928 = pneg %p265
        %s929 = sand.u32 %s38, 1
        %s930 = scalar_lea.sflag [#allocation5], %s929
        %s931 = sand.u32 %s281, 1
        %s932 = scalar_lea.vmem [#allocation15], %s931
        %p933 = pneg %p294
        %p934 = pneg %p291
        %p935 = scmp.lt.s32.totalorder %s38, 1
        %s936 = scalar_select %p935, %s38, 1
        %s937 = smul.addr %s936, 4
        %s938 = smul.addr %s937, 4
        %s939 = scalar_lea.vmem %s11, %s938
        %p940 = pneg %p320
        %p941 = pneg %p317
        %s942 = sand.u32 %s38, 1
        %s943 = scalar_lea.sflag [#allocation5], %s942
        %s944 = sand.u32 %s333, 1
        %s945 = scalar_lea.vmem [#allocation16], %s944
        %p946 = pneg %p346
        %p947 = pneg %p343
        %p948 = scmp.lt.s32.totalorder %s38, 1
        %s949 = scalar_select %p948, %s38, 1
        %s950 = smul.addr %s949, 8
        %s951 = smul.addr %s950, 4
        %s952 = scalar_lea.vmem %s13, %s951
        %p953 = pneg %p372
        %p954 = pneg %p369
        %s955 = sand.u32 %s38, 1
        %s956 = scalar_lea.sflag [#allocation5], %s955
        %s957 = sand.u32 %s385, 1
        %s958 = scalar_lea.vmem [#allocation17], %s957
        %p959 = pneg %p398
        %p960 = pneg %p395
        %s961 = sand.u32 %s38, 1
        %s962 = scalar_lea.sflag [#allocation5], %s961
        %s963 = sand.u32 %s411, 1
        %s964 = scalar_lea.vmem [#allocation18], %s963
        %p965 = pneg %p424
        %p966 = pneg %p421
        %s967 = sand.u32 %s38, 1
        %s968 = scalar_lea.sflag [#allocation5], %s967
        %s969 = sand.u32 %s437, 1
        %s970 = scalar_lea.vmem [#allocation19], %s969
        %p971 = pneg %p450
        %p972 = pneg %p447
        %p973 = pneg %p471
        %p974 = pneg %p468
        %p975 = pneg %p492
        %p976 = pneg %p489
        %p977 = pneg %p513
        %p978 = pneg %p510
        %p979 = pneg %p534
        %p980 = pneg %p531
        %p981 = pneg %p555
        %p982 = pneg %p552
        %p983 = scmp.lt.s32.totalorder %s38, 1
        %s984 = scalar_select %p983, %s38, 1
        %s985 = smul.addr %s984, 4
        %s986 = smul.addr %s985, 4
        %s987 = scalar_lea.vmem %s5, %s986
        %p988 = scmp.lt.s32.totalorder %s38, 1
        %s989 = scalar_select %p988, %s38, 1
        %s990 = smul.addr %s989, 4
        %s991 = smul.addr %s990, 4
        %s992 = scalar_lea.vmem %s7, %s991
        %p993 = scmp.lt.s32.totalorder %s38, 1
        %s994 = scalar_select %p993, %s38, 1
        %s995 = smul.addr %s994, 4
        %s996 = smul.addr %s995, 4
        %s997 = scalar_lea.vmem %s11, %s996
        %p998 = scmp.lt.s32.totalorder %s38, 1
        %s999 = scalar_select %p998, %s38, 1
        %s1000 = smul.addr %s999, 8
        %s1001 = smul.addr %s1000, 4
        %s1002 = scalar_lea.vmem %s13, %s1001
        %p1004 = scmp.eq.s32.totalorder %s38, 0
        // Predicated region
        $region149: #{tpu_custom_call.1} parent=99 // pred_check
          %p1005 = pneg %p1004
        $region150: #{tpu_custom_call.1} parent=99 // pred_check_branch
          %1007 = sbr.rel (%p1005) target = $region152
        $region151: #{tpu_custom_call.1} parent=99 // pred_region
          %v1008 = vld [vmem:[#allocation4] sm:$0xff]
          %v1009 = vld [vmem:[#allocation4 + $0x8] sm:$0xff]
          %v1010 = vld [vmem:[#allocation9] sm:$0x1]
          %v1011 = vld [vmem:[#allocation10] sm:$0x1]
          %vm1012 = vcmask 261120
          %v1013 = vsel %vm1012, %v1008, 0.0
          %1014 = vadd.xlane.f32.xlu0 %v1013
          %v1015 = vpop.xlane.xlu0 %1014
          %v1016 = vsel %vm1012, %v1009, 0.0
          %1017 = vadd.xlane.f32.xlu0 %v1016
          %v1018 = vpop.xlane.xlu0 %1017
          %v1019 = vrcp.pop 32.0
          %v1020 = vmul.f32 %v1015, %v1019
          %v1021 = vmul.f32 %v1018, %v1019
          %v1022 = vsub.f32 %v1008, %v1020
          %v1023 = vsub.f32 %v1009, %v1021
          %v1024 = vmul.f32 %v1022, %v1022
          %v1025 = vmul.f32 %v1023, %v1023
          %v1026 = vsel %vm1012, %v1024, 0.0
          %1027 = vadd.xlane.f32.xlu0 %v1026
          %v1028 = vpop.xlane.xlu0 %1027
          %v1029 = vsel %vm1012, %v1025, 0.0
          %1030 = vadd.xlane.f32.xlu0 %v1029
          %v1031 = vpop.xlane.xlu0 %1030
          %v1032 = vmul.f32 %v1028, %v1019
          %v1033 = vmul.f32 %v1031, %v1019
          %v1034 = vadd.f32 %v1032, 1e-05
          %v1035 = vadd.f32 %v1033, 1e-05
          %v1036 = vrsqrt.pop %v1034
          %v1037 = vrsqrt.pop %v1035
          %v1038 = vmul.f32 %v1022, %v1036
          %v1039 = vmul.f32 %v1023, %v1037
          %v1041 = vlaneseq
          %v1042 = vshrl.u32 %v1041, 7
          %v1043 = vsub.s32 0, %v1042
          %v1044 = vrot.slane %v1010, %v1043
          %v1046 = vmul.f32 %v1038, %v1044
          %v1047 = vmul.f32 %v1039, %v1044
          %v1049 = vlaneseq
          %v1050 = vshrl.u32 %v1049, 7
          %v1051 = vsub.s32 0, %v1050
          %v1052 = vrot.slane %v1011, %v1051
          %v1054 = vadd.f32 %v1046, %v1052
          %v1055 = vadd.f32 %v1047, %v1052
          %1056 = vst.msk [vmem:[#allocation2] sm:$0xff] %vm1012, %v1054
          %1057 = vst.msk [vmem:[#allocation2 + $0x8] sm:$0xff] %vm1012, %v1055
        $region152: #{tpu_custom_call.1} parent=99 // pred_fallthru
          _
        %v1058 = vld [vmem:[#allocation2] sm:$0xff]
        %v1059 = vld [vmem:[#allocation2 + $0x8] sm:$0xff]
        %v1060 = vpack.c.bf16 %v1059, %v1058
        %v1061 = vld [vmem:[%s1] sm:$0xff]
        %v1062 = vld [vmem:[%s1 + $0x8] sm:$0xff]
        %v1063 = vld [vmem:[#allocation7] sm:$0x1]
        %1065 = vset.pattern.permute.xlu0 0
        %1066 = vperm.xlu0 %1065, %v1061
        %v1067 = vpop.permute.xlu0 %1066
        %1070 = vset.pattern.permute.xlu0 0
        %1071 = vperm.xlu0 %1070, %v1062
        %v1072 = vpop.permute.xlu0 %1071
        %v1075 = vlaneseq
        %v1076 = vshrl.u32 %v1075, 7
        %v1077 = vsub.s32 0, %v1076
        %v1078 = vrot.slane %v1063, %v1077
        %vm1080 = vcmp.eq.f32.partialorder %v1067, %v1078
        %vm1081 = vcmp.eq.f32.partialorder %v1072, %v1078
        %v1082 = vld [vmem:[%s987] sm:$0xf]
        %v1083 = vld [vmem:[%s987 + $0x4] sm:$0xf]
        %v1084 = vld [vmem:[%s987 + $0x8] sm:$0xf]
        %v1085 = vld [vmem:[%s987 + $0xc] sm:$0xf]
        %v1086 = vld [vmem:[%s826] sm:$0x1]
        %v1088 = vlaneseq
        %v1089 = vshrl.u32 %v1088, 7
        %v1090 = vsub.s32 0, %v1089
        %v1091 = vrot.slane %v1086, %v1090
        %v1097 = vunpack.c.l.b16 %v1082
        %v1098 = vunpack.c.l.b16 %v1083
        %v1099 = vunpack.c.l.b16 %v1084
        %v1100 = vunpack.c.l.b16 %v1085
        %v1101 = vpack.c.b16 %v1098, %v1097
        %v1102 = vpack.c.b16 %v1100, %v1099
        %vm1105 = vcmask 261120
        %v1107 = vsel %vm1105, %v1060, 0
        %1109 = vmatprep.subr.bf16.mxu0 0
        %1110 = vmatpush1.bf16.msra.mxu0 0
        %1111 = vmatprep.subr.bf16.mxu0 0
        %1112 = vmatpush1.bf16.msra.mxu0 0
        %1113 = vmatprep.subr.bf16.mxu0 0
        %1114 = vmatpush1.bf16.msra.mxu0 0
        %1115 = vmatprep.subr.bf16.mxu0 0
        %1116 = vmatpush1.bf16.msra.mxu0 0
        %1117 = vmatprep.subr.bf16.mxu0 0
        %1118 = vmatpush1.bf16.msra.mxu0 0
        %1119 = vmatprep.subr.bf16.mxu0 0
        %1120 = vmatpush1.bf16.msra.mxu0 0
        %1121 = vmatprep.subr.bf16.mxu0 0
        %1122 = vmatpush1.bf16.msra.mxu0 %v1102
        %1123 = vmatprep.subr.bf16.mxu0 0
        %1124 = vmatpush1.bf16.msra.mxu0 %v1101
        %1125 = vmatprep.subr.bf16.mxu0 0
        %1126 = vmatpush2.bf16.msra.mxu0 0
        %1127 = vmatprep.subr.bf16.mxu0 0
        %1128 = vmatpush2.bf16.msra.mxu0 0
        %1129 = vmatprep.subr.bf16.mxu0 0
        %1130 = vmatpush2.bf16.msra.mxu0 0
        %1131 = vmatprep.subr.bf16.mxu0 0
        %1132 = vmatpush2.bf16.msra.mxu0 0
        %1133 = vmatprep.subr.bf16.mxu0 0
        %1134 = vmatpush2.bf16.msra.mxu0 0
        %1135 = vmatprep.subr.bf16.mxu0 0
        %1136 = vmatpush2.bf16.msra.mxu0 0
        %1137 = vmatprep.subr.bf16.mxu0 0
        %1138 = vmatpush2.bf16.msra.mxu0 0
        %1139 = vmatprep.subr.bf16.mxu0 0
        %1140 = vmatpush2.bf16.msra.mxu0 0
        %1141 = vmatprep.mubr.bf16.mxu0 0
        %1142 = vmatmul.mubr.bf16.gmra.mxu0 %v1107
        %v1143 = vpop.f32.mrf.mxu0
        %v1144 = vadd.f32 %v1091, %v1143
        %v1145 = vpop.f32.mrf.mxu0
        %v1146 = vpop.f32.mrf.mxu0
        %v1147 = vadd.f32 %v1091, %v1146
        %v1148 = vpop.f32.mrf.mxu0
        %1149 = vdwg.mxu0
        %v1150 = vpack.c.bf16 %v1147, %v1144
        %1152 = vrot.lane.b32.xlu0 %v1150, 96
        %v1153 = vpop.permute.xlu0 %1152
        %vm1154 = vcmask 64512
        %v1156 = vsel %vm1154, %v1150, 0
        %v1159 = vsel %vm1154, %v1153, 0
        %1161 = vmatprep.subr.bf16.mxu0 0
        %1162 = vmatpush1.bf16.xpose.msra.mxu0 0
        %1163 = vmatprep.subr.bf16.mxu0 0
        %1164 = vmatpush1.bf16.xpose.msra.mxu0 0
        %1165 = vmatprep.subr.bf16.mxu0 0
        %1166 = vmatpush1.bf16.xpose.msra.mxu0 0
        %1167 = vmatprep.subr.bf16.mxu0 0
        %1168 = vmatpush1.bf16.xpose.msra.mxu0 0
        %1169 = vmatprep.subr.bf16.mxu0 0
        %1170 = vmatpush1.bf16.xpose.msra.mxu0 0
        %1171 = vmatprep.subr.bf16.mxu0 0
        %1172 = vmatpush1.bf16.xpose.msra.mxu0 0
        %1173 = vmatprep.subr.bf16.mxu0 0
        %1174 = vmatpush1.bf16.xpose.msra.mxu0 0
        %1175 = vmatprep.subr.bf16.mxu0 0
        %1176 = vmatpush1.bf16.xpose.msra.mxu0 %v1159
        %1177 = vmatprep.subr.bf16.mxu0 0
        %1178 = vmatpush2.bf16.xpose.msra.mxu0 0
        %1179 = vmatprep.subr.bf16.mxu0 0
        %1180 = vmatpush2.bf16.xpose.msra.mxu0 0
        %1181 = vmatprep.subr.bf16.mxu0 0
        %1182 = vmatpush2.bf16.xpose.msra.mxu0 0
        %1183 = vmatprep.subr.bf16.mxu0 0
        %1184 = vmatpush2.bf16.xpose.msra.mxu0 0
        %1185 = vmatprep.subr.bf16.mxu0 0
        %1186 = vmatpush2.bf16.xpose.msra.mxu0 0
        %1187 = vmatprep.subr.bf16.mxu0 0
        %1188 = vmatpush2.bf16.xpose.msra.mxu0 0
        %1189 = vmatprep.subr.bf16.mxu0 0
        %1190 = vmatpush2.bf16.xpose.msra.mxu0 0
        %1191 = vmatprep.subr.bf16.mxu0 0
        %1192 = vmatpush2.bf16.xpose.msra.mxu0 0
        %1193 = vmatprep.mubr.bf16.mxu0 0
        %1194 = vmatmul.mubr.bf16.gmra.mxu0 %v1156
        %v1195 = vpop.f32.mrf.mxu0
        %v1196 = vadd.f32 0.0, %v1195
        %v1197 = vpop.f32.mrf.mxu0
        %v1198 = vpop.f32.mrf.mxu0
        %v1199 = vadd.f32 0.0, %v1198
        %v1200 = vpop.f32.mrf.mxu0
        %1201 = vdwg.mxu0
        %v1202 = vsel %vm1080, %v1196, -1e+30
        %v1203 = vsel %vm1081, %v1199, -1e+30
        %vm1204 = vcmask 130048
        %v1205 = vsel %vm1204, %v1202, -inf
        %1206 = vmax.xlane.f32.xlu0 %v1205
        %v1207 = vpop.xlane.xlu0 %1206
        %v1208 = vsel %vm1204, %v1203, -inf
        %1209 = vmax.xlane.f32.xlu0 %v1208
        %v1210 = vpop.xlane.xlu0 %1209
        %v1211 = vsub.f32 %v1202, %v1207
        %v1212 = vsub.f32 %v1203, %v1210
        %v1213 = vmul.f32 %v1211, 1.442695
        %v1214 = vpow.pop %v1213
        %v1215 = vmul.f32 %v1212, 1.442695
        %v1216 = vpow.pop %v1215
        %v1217 = vsel %vm1204, %v1214, 0.0
        %1218 = vadd.xlane.f32.xlu0 %v1217
        %v1219 = vpop.xlane.xlu0 %1218
        %v1220 = vsel %vm1204, %v1216, 0.0
        %1221 = vadd.xlane.f32.xlu0 %v1220
        %v1222 = vpop.xlane.xlu0 %1221
        %v1223 = vrcp.pop %v1219
        %v1224 = vrcp.pop %v1222
        %v1225 = vmul.f32 %v1214, %v1223
        %v1226 = vmul.f32 %v1216, %v1224
        %v1227 = vpack.c.bf16 %v1226, %v1225
        %1228 = vrot.lane.b32.xlu0 %v1150, 64
        %v1229 = vpop.permute.xlu0 %1228
        %v1232 = vsel %vm1204, %v1227, 0
        %1234 = vmatprep.subr.bf16.mxu0 0
        %1235 = vmatpush1.bf16.msra.mxu0 0
        %1236 = vmatprep.subr.bf16.mxu0 0
        %1237 = vmatpush1.bf16.msra.mxu0 0
        %1238 = vmatprep.subr.bf16.mxu0 0
        %1239 = vmatpush1.bf16.msra.mxu0 0
        %1240 = vmatprep.subr.bf16.mxu0 0
        %1241 = vmatpush1.bf16.msra.mxu0 0
        %1242 = vmatprep.subr.bf16.mxu0 0
        %1243 = vmatpush1.bf16.msra.mxu0 0
        %1244 = vmatprep.subr.bf16.mxu0 0
        %1245 = vmatpush1.bf16.msra.mxu0 0
        %1246 = vmatprep.subr.bf16.mxu0 0
        %1247 = vmatpush1.bf16.msra.mxu0 0
        %1248 = vmatprep.subr.bf16.mxu0 0
        %1249 = vmatpush1.bf16.msra.mxu0 %v1229
        %1250 = vmatprep.subr.bf16.mxu0 0
        %1251 = vmatpush2.bf16.msra.mxu0 0
        %1252 = vmatprep.subr.bf16.mxu0 0
        %1253 = vmatpush2.bf16.msra.mxu0 0
        %1254 = vmatprep.subr.bf16.mxu0 0
        %1255 = vmatpush2.bf16.msra.mxu0 0
        %1256 = vmatprep.subr.bf16.mxu0 0
        %1257 = vmatpush2.bf16.msra.mxu0 0
        %1258 = vmatprep.subr.bf16.mxu0 0
        %1259 = vmatpush2.bf16.msra.mxu0 0
        %1260 = vmatprep.subr.bf16.mxu0 0
        %1261 = vmatpush2.bf16.msra.mxu0 0
        %1262 = vmatprep.subr.bf16.mxu0 0
        %1263 = vmatpush2.bf16.msra.mxu0 0
        %1264 = vmatprep.subr.bf16.mxu0 0
        %1265 = vmatpush2.bf16.msra.mxu0 0
        %1266 = vmatprep.mubr.bf16.mxu0 0
        %1267 = vmatmul.mubr.bf16.gmra.mxu0 %v1232
        %v1268 = vpop.f32.mrf.mxu0
        %v1269 = vadd.f32 0.0, %v1268
        %v1270 = vpop.f32.mrf.mxu0
        %v1271 = vpop.f32.mrf.mxu0
        %v1272 = vadd.f32 0.0, %v1271
        %v1273 = vpop.f32.mrf.mxu0
        %1274 = vdwg.mxu0
        %1275 = vst.msk [vmem:[#allocation3] sm:$0xff] %vm1154, %v1269
        %1276 = vst.msk [vmem:[#allocation3 + $0x8] sm:$0xff] %vm1154, %v1272
        %1277 = vrot.lane.b32.xlu0 %v1150, 120
        %v1278 = vpop.permute.xlu0 %1277
        %1279 = vrot.lane.b32.xlu0 %v1150, 88
        %v1280 = vpop.permute.xlu0 %1279
        %v1282 = vsel %vm1154, %v1278, 0
        %v1285 = vsel %vm1154, %v1280, 0
        %1287 = vmatprep.subr.bf16.mxu0 0
        %1288 = vmatpush1.bf16.xpose.msra.mxu0 0
        %1289 = vmatprep.subr.bf16.mxu0 0
        %1290 = vmatpush1.bf16.xpose.msra.mxu0 0
        %1291 = vmatprep.subr.bf16.mxu0 0
        %1292 = vmatpush1.bf16.xpose.msra.mxu0 0
        %1293 = vmatprep.subr.bf16.mxu0 0
        %1294 = vmatpush1.bf16.xpose.msra.mxu0 0
        %1295 = vmatprep.subr.bf16.mxu0 0
        %1296 = vmatpush1.bf16.xpose.msra.mxu0 0
        %1297 = vmatprep.subr.bf16.mxu0 0
        %1298 = vmatpush1.bf16.xpose.msra.mxu0 0
        %1299 = vmatprep.subr.bf16.mxu0 0
        %1300 = vmatpush1.bf16.xpose.msra.mxu0 0
        %1301 = vmatprep.subr.bf16.mxu0 0
        %1302 = vmatpush1.bf16.xpose.msra.mxu0 %v1285
        %1303 = vmatprep.subr.bf16.mxu0 0
        %1304 = vmatpush2.bf16.xpose.msra.mxu0 0
        %1305 = vmatprep.subr.bf16.mxu0 0
        %1306 = vmatpush2.bf16.xpose.msra.mxu0 0
        %1307 = vmatprep.subr.bf16.mxu0 0
        %1308 = vmatpush2.bf16.xpose.msra.mxu0 0
        %1309 = vmatprep.subr.bf16.mxu0 0
        %1310 = vmatpush2.bf16.xpose.msra.mxu0 0
        %1311 = vmatprep.subr.bf16.mxu0 0
        %1312 = vmatpush2.bf16.xpose.msra.mxu0 0
        %1313 = vmatprep.subr.bf16.mxu0 0
        %1314 = vmatpush2.bf16.xpose.msra.mxu0 0
        %1315 = vmatprep.subr.bf16.mxu0 0
        %1316 = vmatpush2.bf16.xpose.msra.mxu0 0
        %1317 = vmatprep.subr.bf16.mxu0 0
        %1318 = vmatpush2.bf16.xpose.msra.mxu0 0
        %1319 = vmatprep.mubr.bf16.mxu0 0
        %1320 = vmatmul.mubr.bf16.gmra.mxu0 %v1282
        %v1321 = vpop.f32.mrf.mxu0
        %v1322 = vadd.f32 0.0, %v1321
        %v1323 = vpop.f32.mrf.mxu0
        %v1324 = vpop.f32.mrf.mxu0
        %v1325 = vadd.f32 0.0, %v1324
        %v1326 = vpop.f32.mrf.mxu0
        %1327 = vdwg.mxu0
        %v1328 = vsel %vm1080, %v1322, -1e+30
        %v1329 = vsel %vm1081, %v1325, -1e+30
        %v1330 = vsel %vm1204, %v1328, -inf
        %1331 = vmax.xlane.f32.xlu0 %v1330
        %v1332 = vpop.xlane.xlu0 %1331
        %v1333 = vsel %vm1204, %v1329, -inf
        %1334 = vmax.xlane.f32.xlu0 %v1333
        %v1335 = vpop.xlane.xlu0 %1334
        %v1336 = vsub.f32 %v1328, %v1332
        %v1337 = vsub.f32 %v1329, %v1335
        %v1338 = vmul.f32 %v1336, 1.442695
        %v1339 = vpow.pop %v1338
        %v1340 = vmul.f32 %v1337, 1.442695
        %v1341 = vpow.pop %v1340
        %v1342 = vsel %vm1204, %v1339, 0.0
        %1343 = vadd.xlane.f32.xlu0 %v1342
        %v1344 = vpop.xlane.xlu0 %1343
        %v1345 = vsel %vm1204, %v1341, 0.0
        %1346 = vadd.xlane.f32.xlu0 %v1345
        %v1347 = vpop.xlane.xlu0 %1346
        %v1348 = vrcp.pop %v1344
        %v1349 = vrcp.pop %v1347
        %v1350 = vmul.f32 %v1339, %v1348
        %v1351 = vmul.f32 %v1341, %v1349
        %v1352 = vpack.c.bf16 %v1351, %v1350
        %1353 = vrot.lane.b32.xlu0 %v1150, 56
        %v1354 = vpop.permute.xlu0 %1353
        %v1357 = vsel %vm1204, %v1352, 0
        %1359 = vmatprep.subr.bf16.mxu0 0
        %1360 = vmatpush1.bf16.msra.mxu0 0
        %1361 = vmatprep.subr.bf16.mxu0 0
        %1362 = vmatpush1.bf16.msra.mxu0 0
        %1363 = vmatprep.subr.bf16.mxu0 0
        %1364 = vmatpush1.bf16.msra.mxu0 0
        %1365 = vmatprep.subr.bf16.mxu0 0
        %1366 = vmatpush1.bf16.msra.mxu0 0
        %1367 = vmatprep.subr.bf16.mxu0 0
        %1368 = vmatpush1.bf16.msra.mxu0 0
        %1369 = vmatprep.subr.bf16.mxu0 0
        %1370 = vmatpush1.bf16.msra.mxu0 0
        %1371 = vmatprep.subr.bf16.mxu0 0
        %1372 = vmatpush1.bf16.msra.mxu0 0
        %1373 = vmatprep.subr.bf16.mxu0 0
        %1374 = vmatpush1.bf16.msra.mxu0 %v1354
        %1375 = vmatprep.subr.bf16.mxu0 0
        %1376 = vmatpush2.bf16.msra.mxu0 0
        %1377 = vmatprep.subr.bf16.mxu0 0
        %1378 = vmatpush2.bf16.msra.mxu0 0
        %1379 = vmatprep.subr.bf16.mxu0 0
        %1380 = vmatpush2.bf16.msra.mxu0 0
        %1381 = vmatprep.subr.bf16.mxu0 0
        %1382 = vmatpush2.bf16.msra.mxu0 0
        %1383 = vmatprep.subr.bf16.mxu0 0
        %1384 = vmatpush2.bf16.msra.mxu0 0
        %1385 = vmatprep.subr.bf16.mxu0 0
        %1386 = vmatpush2.bf16.msra.mxu0 0
        %1387 = vmatprep.subr.bf16.mxu0 0
        %1388 = vmatpush2.bf16.msra.mxu0 0
        %1389 = vmatprep.subr.bf16.mxu0 0
        %1390 = vmatpush2.bf16.msra.mxu0 0
        %1391 = vmatprep.mubr.bf16.mxu0 0
        %1392 = vmatmul.mubr.bf16.gmra.mxu0 %v1357
        %v1393 = vpop.f32.mrf.mxu0
        %v1394 = vadd.f32 0.0, %v1393
        %v1395 = vpop.f32.mrf.mxu0
        %v1396 = vpop.f32.mrf.mxu0
        %v1397 = vadd.f32 0.0, %v1396
        %v1398 = vpop.f32.mrf.mxu0
        %1399 = vdwg.mxu0
        %1402 = vrot.lane.b32.xlu0 %v1394, 8
        %v1403 = vpop.permute.xlu0 %1402
        %1404 = vrot.lane.b32.xlu0 %v1397, 8
        %v1405 = vpop.permute.xlu0 %1404
        %vm1408 = vcmask 130112
        %1409 = vst.msk [vmem:[#allocation3] sm:$0xff] %vm1408, %v1403
        %1410 = vst.msk [vmem:[#allocation3 + $0x8] sm:$0xff] %vm1408, %v1405
        %1411 = vrot.lane.b32.xlu0 %v1150, 112
        %v1412 = vpop.permute.xlu0 %1411
        %1413 = vrot.lane.b32.xlu0 %v1150, 80
        %v1414 = vpop.permute.xlu0 %1413
        %v1416 = vsel %vm1154, %v1412, 0
        %v1419 = vsel %vm1154, %v1414, 0
        %1421 = vmatprep.subr.bf16.mxu0 0
        %1422 = vmatpush1.bf16.xpose.msra.mxu0 0
        %1423 = vmatprep.subr.bf16.mxu0 0
        %1424 = vmatpush1.bf16.xpose.msra.mxu0 0
        %1425 = vmatprep.subr.bf16.mxu0 0
        %1426 = vmatpush1.bf16.xpose.msra.mxu0 0
        %1427 = vmatprep.subr.bf16.mxu0 0
        %1428 = vmatpush1.bf16.xpose.msra.mxu0 0
        %1429 = vmatprep.subr.bf16.mxu0 0
        %1430 = vmatpush1.bf16.xpose.msra.mxu0 0
        %1431 = vmatprep.subr.bf16.mxu0 0
        %1432 = vmatpush1.bf16.xpose.msra.mxu0 0
        %1433 = vmatprep.subr.bf16.mxu0 0
        %1434 = vmatpush1.bf16.xpose.msra.mxu0 0
        %1435 = vmatprep.subr.bf16.mxu0 0
        %1436 = vmatpush1.bf16.xpose.msra.mxu0 %v1419
        %1437 = vmatprep.subr.bf16.mxu0 0
        %1438 = vmatpush2.bf16.xpose.msra.mxu0 0
        %1439 = vmatprep.subr.bf16.mxu0 0
        %1440 = vmatpush2.bf16.xpose.msra.mxu0 0
        %1441 = vmatprep.subr.bf16.mxu0 0
        %1442 = vmatpush2.bf16.xpose.msra.mxu0 0
        %1443 = vmatprep.subr.bf16.mxu0 0
        %1444 = vmatpush2.bf16.xpose.msra.mxu0 0
        %1445 = vmatprep.subr.bf16.mxu0 0
        %1446 = vmatpush2.bf16.xpose.msra.mxu0 0
        %1447 = vmatprep.subr.bf16.mxu0 0
        %1448 = vmatpush2.bf16.xpose.msra.mxu0 0
        %1449 = vmatprep.subr.bf16.mxu0 0
        %1450 = vmatpush2.bf16.xpose.msra.mxu0 0
        %1451 = vmatprep.subr.bf16.mxu0 0
        %1452 = vmatpush2.bf16.xpose.msra.mxu0 0
        %1453 = vmatprep.mubr.bf16.mxu0 0
        %1454 = vmatmul.mubr.bf16.gmra.mxu0 %v1416
        %v1455 = vpop.f32.mrf.mxu0
        %v1456 = vadd.f32 0.0, %v1455
        %v1457 = vpop.f32.mrf.mxu0
        %v1458 = vpop.f32.mrf.mxu0
        %v1459 = vadd.f32 0.0, %v1458
        %v1460 = vpop.f32.mrf.mxu0
        %1461 = vdwg.mxu0
        %v1462 = vsel %vm1080, %v1456, -1e+30
        %v1463 = vsel %vm1081, %v1459, -1e+30
        %v1464 = vsel %vm1204, %v1462, -inf
        %1465 = vmax.xlane.f32.xlu0 %v1464
        %v1466 = vpop.xlane.xlu0 %1465
        %v1467 = vsel %vm1204, %v1463, -inf
        %1468 = vmax.xlane.f32.xlu0 %v1467
        %v1469 = vpop.xlane.xlu0 %1468
        %v1470 = vsub.f32 %v1462, %v1466
        %v1471 = vsub.f32 %v1463, %v1469
        %v1472 = vmul.f32 %v1470, 1.442695
        %v1473 = vpow.pop %v1472
        %v1474 = vmul.f32 %v1471, 1.442695
        %v1475 = vpow.pop %v1474
        %v1476 = vsel %vm1204, %v1473, 0.0
        %1477 = vadd.xlane.f32.xlu0 %v1476
        %v1478 = vpop.xlane.xlu0 %1477
        %v1479 = vsel %vm1204, %v1475, 0.0
        %1480 = vadd.xlane.f32.xlu0 %v1479
        %v1481 = vpop.xlane.xlu0 %1480
        %v1482 = vrcp.pop %v1478
        %v1483 = vrcp.pop %v1481
        %v1484 = vmul.f32 %v1473, %v1482
        %v1485 = vmul.f32 %v1475, %v1483
        %v1486 = vpack.c.bf16 %v1485, %v1484
        %1487 = vrot.lane.b32.xlu0 %v1150, 48
        %v1488 = vpop.permute.xlu0 %1487
        %v1491 = vsel %vm1204, %v1486, 0
        %1493 = vmatprep.subr.bf16.mxu0 0
        %1494 = vmatpush1.bf16.msra.mxu0 0
        %1495 = vmatprep.subr.bf16.mxu0 0
        %1496 = vmatpush1.bf16.msra.mxu0 0
        %1497 = vmatprep.subr.bf16.mxu0 0
        %1498 = vmatpush1.bf16.msra.mxu0 0
        %1499 = vmatprep.subr.bf16.mxu0 0
        %1500 = vmatpush1.bf16.msra.mxu0 0
        %1501 = vmatprep.subr.bf16.mxu0 0
        %1502 = vmatpush1.bf16.msra.mxu0 0
        %1503 = vmatprep.subr.bf16.mxu0 0
        %1504 = vmatpush1.bf16.msra.mxu0 0
        %1505 = vmatprep.subr.bf16.mxu0 0
        %1506 = vmatpush1.bf16.msra.mxu0 0
        %1507 = vmatprep.subr.bf16.mxu0 0
        %1508 = vmatpush1.bf16.msra.mxu0 %v1488
        %1509 = vmatprep.subr.bf16.mxu0 0
        %1510 = vmatpush2.bf16.msra.mxu0 0
        %1511 = vmatprep.subr.bf16.mxu0 0
        %1512 = vmatpush2.bf16.msra.mxu0 0
        %1513 = vmatprep.subr.bf16.mxu0 0
        %1514 = vmatpush2.bf16.msra.mxu0 0
        %1515 = vmatprep.subr.bf16.mxu0 0
        %1516 = vmatpush2.bf16.msra.mxu0 0
        %1517 = vmatprep.subr.bf16.mxu0 0
        %1518 = vmatpush2.bf16.msra.mxu0 0
        %1519 = vmatprep.subr.bf16.mxu0 0
        %1520 = vmatpush2.bf16.msra.mxu0 0
        %1521 = vmatprep.subr.bf16.mxu0 0
        %1522 = vmatpush2.bf16.msra.mxu0 0
        %1523 = vmatprep.subr.bf16.mxu0 0
        %1524 = vmatpush2.bf16.msra.mxu0 0
        %1525 = vmatprep.mubr.bf16.mxu0 0
        %1526 = vmatmul.mubr.bf16.gmra.mxu0 %v1491
        %v1527 = vpop.f32.mrf.mxu0
        %v1528 = vadd.f32 0.0, %v1527
        %v1529 = vpop.f32.mrf.mxu0
        %v1530 = vpop.f32.mrf.mxu0
        %v1531 = vadd.f32 0.0, %v1530
        %v1532 = vpop.f32.mrf.mxu0
        %1533 = vdwg.mxu0
        %1536 = vrot.lane.b32.xlu0 %v1528, 16
        %v1537 = vpop.permute.xlu0 %1536
        %1538 = vrot.lane.b32.xlu0 %v1531, 16
        %v1539 = vpop.permute.xlu0 %1538
        %vm1542 = vcmask 195712
        %1543 = vst.msk [vmem:[#allocation3] sm:$0xff] %vm1542, %v1537
        %1544 = vst.msk [vmem:[#allocation3 + $0x8] sm:$0xff] %vm1542, %v1539
        %1545 = vrot.lane.b32.xlu0 %v1150, 104
        %v1546 = vpop.permute.xlu0 %1545
        %1547 = vrot.lane.b32.xlu0 %v1150, 72
        %v1548 = vpop.permute.xlu0 %1547
        %v1550 = vsel %vm1154, %v1546, 0
        %v1553 = vsel %vm1154, %v1548, 0
        %1555 = vmatprep.subr.bf16.mxu0 0
        %1556 = vmatpush1.bf16.xpose.msra.mxu0 0
        %1557 = vmatprep.subr.bf16.mxu0 0
        %1558 = vmatpush1.bf16.xpose.msra.mxu0 0
        %1559 = vmatprep.subr.bf16.mxu0 0
        %1560 = vmatpush1.bf16.xpose.msra.mxu0 0
        %1561 = vmatprep.subr.bf16.mxu0 0
        %1562 = vmatpush1.bf16.xpose.msra.mxu0 0
        %1563 = vmatprep.subr.bf16.mxu0 0
        %1564 = vmatpush1.bf16.xpose.msra.mxu0 0
        %1565 = vmatprep.subr.bf16.mxu0 0
        %1566 = vmatpush1.bf16.xpose.msra.mxu0 0
        %1567 = vmatprep.subr.bf16.mxu0 0
        %1568 = vmatpush1.bf16.xpose.msra.mxu0 0
        %1569 = vmatprep.subr.bf16.mxu0 0
        %1570 = vmatpush1.bf16.xpose.msra.mxu0 %v1553
        %1571 = vmatprep.subr.bf16.mxu0 0
        %1572 = vmatpush2.bf16.xpose.msra.mxu0 0
        %1573 = vmatprep.subr.bf16.mxu0 0
        %1574 = vmatpush2.bf16.xpose.msra.mxu0 0
        %1575 = vmatprep.subr.bf16.mxu0 0
        %1576 = vmatpush2.bf16.xpose.msra.mxu0 0
        %1577 = vmatprep.subr.bf16.mxu0 0
        %1578 = vmatpush2.bf16.xpose.msra.mxu0 0
        %1579 = vmatprep.subr.bf16.mxu0 0
        %1580 = vmatpush2.bf16.xpose.msra.mxu0 0
        %1581 = vmatprep.subr.bf16.mxu0 0
        %1582 = vmatpush2.bf16.xpose.msra.mxu0 0
        %1583 = vmatprep.subr.bf16.mxu0 0
        %1584 = vmatpush2.bf16.xpose.msra.mxu0 0
        %1585 = vmatprep.subr.bf16.mxu0 0
        %1586 = vmatpush2.bf16.xpose.msra.mxu0 0
        %1587 = vmatprep.mubr.bf16.mxu0 0
        %1588 = vmatmul.mubr.bf16.gmra.mxu0 %v1550
        %v1589 = vpop.f32.mrf.mxu0
        %v1590 = vadd.f32 0.0, %v1589
        %v1591 = vpop.f32.mrf.mxu0
        %v1592 = vpop.f32.mrf.mxu0
        %v1593 = vadd.f32 0.0, %v1592
        %v1594 = vpop.f32.mrf.mxu0
        %1595 = vdwg.mxu0
        %v1596 = vsel %vm1080, %v1590, -1e+30
        %v1597 = vsel %vm1081, %v1593, -1e+30
        %v1598 = vsel %vm1204, %v1596, -inf
        %1599 = vmax.xlane.f32.xlu0 %v1598
        %v1600 = vpop.xlane.xlu0 %1599
        %v1601 = vsel %vm1204, %v1597, -inf
        %1602 = vmax.xlane.f32.xlu0 %v1601
        %v1603 = vpop.xlane.xlu0 %1602
        %v1604 = vsub.f32 %v1596, %v1600
        %v1605 = vsub.f32 %v1597, %v1603
        %v1606 = vmul.f32 %v1604, 1.442695
        %v1607 = vpow.pop %v1606
        %v1608 = vmul.f32 %v1605, 1.442695
        %v1609 = vpow.pop %v1608
        %v1610 = vsel %vm1204, %v1607, 0.0
        %1611 = vadd.xlane.f32.xlu0 %v1610
        %v1612 = vpop.xlane.xlu0 %1611
        %v1613 = vsel %vm1204, %v1609, 0.0
        %1614 = vadd.xlane.f32.xlu0 %v1613
        %v1615 = vpop.xlane.xlu0 %1614
        %v1616 = vrcp.pop %v1612
        %v1617 = vrcp.pop %v1615
        %v1618 = vmul.f32 %v1607, %v1616
        %v1619 = vmul.f32 %v1609, %v1617
        %v1620 = vpack.c.bf16 %v1619, %v1618
        %1621 = vrot.lane.b32.xlu0 %v1150, 40
        %v1622 = vpop.permute.xlu0 %1621
        %v1625 = vsel %vm1204, %v1620, 0
        %1627 = vmatprep.subr.bf16.mxu0 0
        %1628 = vmatpush1.bf16.msra.mxu0 0
        %1629 = vmatprep.subr.bf16.mxu0 0
        %1630 = vmatpush1.bf16.msra.mxu0 0
        %1631 = vmatprep.subr.bf16.mxu0 0
        %1632 = vmatpush1.bf16.msra.mxu0 0
        %1633 = vmatprep.subr.bf16.mxu0 0
        %1634 = vmatpush1.bf16.msra.mxu0 0
        %1635 = vmatprep.subr.bf16.mxu0 0
        %1636 = vmatpush1.bf16.msra.mxu0 0
        %1637 = vmatprep.subr.bf16.mxu0 0
        %1638 = vmatpush1.bf16.msra.mxu0 0
        %1639 = vmatprep.subr.bf16.mxu0 0
        %1640 = vmatpush1.bf16.msra.mxu0 0
        %1641 = vmatprep.subr.bf16.mxu0 0
        %1642 = vmatpush1.bf16.msra.mxu0 %v1622
        %1643 = vmatprep.subr.bf16.mxu0 0
        %1644 = vmatpush2.bf16.msra.mxu0 0
        %1645 = vmatprep.subr.bf16.mxu0 0
        %1646 = vmatpush2.bf16.msra.mxu0 0
        %1647 = vmatprep.subr.bf16.mxu0 0
        %1648 = vmatpush2.bf16.msra.mxu0 0
        %1649 = vmatprep.subr.bf16.mxu0 0
        %1650 = vmatpush2.bf16.msra.mxu0 0
        %1651 = vmatprep.subr.bf16.mxu0 0
        %1652 = vmatpush2.bf16.msra.mxu0 0
        %1653 = vmatprep.subr.bf16.mxu0 0
        %1654 = vmatpush2.bf16.msra.mxu0 0
        %1655 = vmatprep.subr.bf16.mxu0 0
        %1656 = vmatpush2.bf16.msra.mxu0 0
        %1657 = vmatprep.subr.bf16.mxu0 0
        %1658 = vmatpush2.bf16.msra.mxu0 0
        %1659 = vmatprep.mubr.bf16.mxu0 0
        %1660 = vmatmul.mubr.bf16.gmra.mxu0 %v1625
        %v1661 = vpop.f32.mrf.mxu0
        %v1662 = vadd.f32 0.0, %v1661
        %v1663 = vpop.f32.mrf.mxu0
        %v1664 = vpop.f32.mrf.mxu0
        %v1665 = vadd.f32 0.0, %v1664
        %v1666 = vpop.f32.mrf.mxu0
        %1667 = vdwg.mxu0
        %1670 = vrot.lane.b32.xlu0 %v1662, 24
        %v1671 = vpop.permute.xlu0 %1670
        %1672 = vrot.lane.b32.xlu0 %v1665, 24
        %v1673 = vpop.permute.xlu0 %1672
        %vm1676 = vcmask 261312
        %1677 = vst.msk [vmem:[#allocation3] sm:$0xff] %vm1676, %v1671
        %1678 = vst.msk [vmem:[#allocation3 + $0x8] sm:$0xff] %vm1676, %v1673
        %v1679 = vld [vmem:[#allocation3] sm:$0xff]
        %v1680 = vld [vmem:[#allocation3 + $0x8] sm:$0xff]
        %v1681 = vpack.c.bf16 %v1680, %v1679
        %v1682 = vld [vmem:[%s992] sm:$0xf]
        %v1683 = vld [vmem:[%s992 + $0x4] sm:$0xf]
        %v1684 = vld [vmem:[%s992 + $0x8] sm:$0xf]
        %v1685 = vld [vmem:[%s992 + $0xc] sm:$0xf]
        %v1686 = vld [vmem:[%s834] sm:$0x1]
        %v1688 = vlaneseq
        %v1689 = vshrl.u32 %v1688, 7
        %v1690 = vsub.s32 0, %v1689
        %v1691 = vrot.slane %v1686, %v1690
        %v1697 = vunpack.c.l.b16 %v1682
        %v1698 = vunpack.c.l.b16 %v1683
        %v1699 = vunpack.c.l.b16 %v1684
        %v1700 = vunpack.c.l.b16 %v1685
        %v1701 = vpack.c.b16 %v1698, %v1697
        %v1702 = vpack.c.b16 %v1700, %v1699
        %v1706 = vsel %vm1105, %v1681, 0
        %1708 = vmatprep.subr.bf16.mxu0 0
        %1709 = vmatpush1.bf16.msra.mxu0 0
        %1710 = vmatprep.subr.bf16.mxu0 0
        %1711 = vmatpush1.bf16.msra.mxu0 0
        %1712 = vmatprep.subr.bf16.mxu0 0
        %1713 = vmatpush1.bf16.msra.mxu0 0
        %1714 = vmatprep.subr.bf16.mxu0 0
        %1715 = vmatpush1.bf16.msra.mxu0 0
        %1716 = vmatprep.subr.bf16.mxu0 0
        %1717 = vmatpush1.bf16.msra.mxu0 0
        %1718 = vmatprep.subr.bf16.mxu0 0
        %1719 = vmatpush1.bf16.msra.mxu0 0
        %1720 = vmatprep.subr.bf16.mxu0 0
        %1721 = vmatpush1.bf16.msra.mxu0 %v1702
        %1722 = vmatprep.subr.bf16.mxu0 0
        %1723 = vmatpush1.bf16.msra.mxu0 %v1701
        %1724 = vmatprep.subr.bf16.mxu0 0
        %1725 = vmatpush2.bf16.msra.mxu0 0
        %1726 = vmatprep.subr.bf16.mxu0 0
        %1727 = vmatpush2.bf16.msra.mxu0 0
        %1728 = vmatprep.subr.bf16.mxu0 0
        %1729 = vmatpush2.bf16.msra.mxu0 0
        %1730 = vmatprep.subr.bf16.mxu0 0
        %1731 = vmatpush2.bf16.msra.mxu0 0
        %1732 = vmatprep.subr.bf16.mxu0 0
        %1733 = vmatpush2.bf16.msra.mxu0 0
        %1734 = vmatprep.subr.bf16.mxu0 0
        %1735 = vmatpush2.bf16.msra.mxu0 0
        %1736 = vmatprep.subr.bf16.mxu0 0
        %1737 = vmatpush2.bf16.msra.mxu0 0
        %1738 = vmatprep.subr.bf16.mxu0 0
        %1739 = vmatpush2.bf16.msra.mxu0 0
        %1740 = vmatprep.mubr.bf16.mxu0 0
        %1741 = vmatmul.mubr.bf16.gmra.mxu0 %v1706
        %v1742 = vpop.f32.mrf.mxu0
        %v1743 = vadd.f32 %v1691, %v1742
        %v1744 = vpop.f32.mrf.mxu0
        %v1745 = vpop.f32.mrf.mxu0
        %v1746 = vadd.f32 %v1691, %v1745
        %v1747 = vpop.f32.mrf.mxu0
        %1748 = vdwg.mxu0
        %v1749 = vadd.f32 %v1058, %v1743
        %v1750 = vadd.f32 %v1059, %v1746
        %v1751 = vld [vmem:[%s842] sm:$0x1]
        %v1752 = vld [vmem:[%s850] sm:$0x1]
        %v1753 = vsel %vm1105, %v1749, 0.0
        %1754 = vadd.xlane.f32.xlu0 %v1753
        %v1755 = vpop.xlane.xlu0 %1754
        %v1756 = vsel %vm1105, %v1750, 0.0
        %1757 = vadd.xlane.f32.xlu0 %v1756
        %v1758 = vpop.xlane.xlu0 %1757
        %v1759 = vrcp.pop 32.0
        %v1760 = vmul.f32 %v1755, %v1759
        %v1761 = vmul.f32 %v1758, %v1759
        %v1762 = vsub.f32 %v1749, %v1760
        %v1763 = vsub.f32 %v1750, %v1761
        %v1764 = vmul.f32 %v1762, %v1762
        %v1765 = vmul.f32 %v1763, %v1763
        %v1766 = vsel %vm1105, %v1764, 0.0
        %1767 = vadd.xlane.f32.xlu0 %v1766
        %v1768 = vpop.xlane.xlu0 %1767
        %v1769 = vsel %vm1105, %v1765, 0.0
        %1770 = vadd.xlane.f32.xlu0 %v1769
        %v1771 = vpop.xlane.xlu0 %1770
        %v1772 = vmul.f32 %v1768, %v1759
        %v1773 = vmul.f32 %v1771, %v1759
        %v1774 = vadd.f32 %v1772, 1e-05
        %v1775 = vadd.f32 %v1773, 1e-05
        %v1776 = vrsqrt.pop %v1774
        %v1777 = vrsqrt.pop %v1775
        %v1778 = vmul.f32 %v1762, %v1776
        %v1779 = vmul.f32 %v1763, %v1777
        %v1781 = vlaneseq
        %v1782 = vshrl.u32 %v1781, 7
        %v1783 = vsub.s32 0, %v1782
        %v1784 = vrot.slane %v1751, %v1783
        %v1786 = vmul.f32 %v1778, %v1784
        %v1787 = vmul.f32 %v1779, %v1784
        %v1789 = vlaneseq
        %v1790 = vshrl.u32 %v1789, 7
        %v1791 = vsub.s32 0, %v1790
        %v1792 = vrot.slane %v1752, %v1791
        %v1794 = vadd.f32 %v1786, %v1792
        %v1795 = vadd.f32 %v1787, %v1792
        %v1796 = vpack.c.bf16 %v1795, %v1794
        %v1797 = vld [vmem:[%s997] sm:$0xf]
        %v1798 = vld [vmem:[%s997 + $0x4] sm:$0xf]
        %v1799 = vld [vmem:[%s997 + $0x8] sm:$0xf]
        %v1800 = vld [vmem:[%s997 + $0xc] sm:$0xf]
        %v1801 = vld [vmem:[%s858] sm:$0x1]
        %v1803 = vlaneseq
        %v1804 = vshrl.u32 %v1803, 7
        %v1805 = vsub.s32 0, %v1804
        %v1806 = vrot.slane %v1801, %v1805
        %v1812 = vunpack.c.l.b16 %v1797
        %v1813 = vunpack.c.l.b16 %v1798
        %v1814 = vunpack.c.l.b16 %v1799
        %v1815 = vunpack.c.l.b16 %v1800
        %v1816 = vpack.c.b16 %v1813, %v1812
        %v1817 = vpack.c.b16 %v1815, %v1814
        %v1821 = vsel %vm1105, %v1796, 0
        %1823 = vmatprep.subr.bf16.mxu0 0
        %1824 = vmatpush1.bf16.msra.mxu0 0
        %1825 = vmatprep.subr.bf16.mxu0 0
        %1826 = vmatpush1.bf16.msra.mxu0 0
        %1827 = vmatprep.subr.bf16.mxu0 0
        %1828 = vmatpush1.bf16.msra.mxu0 0
        %1829 = vmatprep.subr.bf16.mxu0 0
        %1830 = vmatpush1.bf16.msra.mxu0 0
        %1831 = vmatprep.subr.bf16.mxu0 0
        %1832 = vmatpush1.bf16.msra.mxu0 0
        %1833 = vmatprep.subr.bf16.mxu0 0
        %1834 = vmatpush1.bf16.msra.mxu0 0
        %1835 = vmatprep.subr.bf16.mxu0 0
        %1836 = vmatpush1.bf16.msra.mxu0 %v1817
        %1837 = vmatprep.subr.bf16.mxu0 0
        %1838 = vmatpush1.bf16.msra.mxu0 %v1816
        %1839 = vmatprep.subr.bf16.mxu0 0
        %1840 = vmatpush2.bf16.msra.mxu0 0
        %1841 = vmatprep.subr.bf16.mxu0 0
        %1842 = vmatpush2.bf16.msra.mxu0 0
        %1843 = vmatprep.subr.bf16.mxu0 0
        %1844 = vmatpush2.bf16.msra.mxu0 0
        %1845 = vmatprep.subr.bf16.mxu0 0
        %1846 = vmatpush2.bf16.msra.mxu0 0
        %1847 = vmatprep.subr.bf16.mxu0 0
        %1848 = vmatpush2.bf16.msra.mxu0 0
        %1849 = vmatprep.subr.bf16.mxu0 0
        %1850 = vmatpush2.bf16.msra.mxu0 0
        %1851 = vmatprep.subr.bf16.mxu0 0
        %1852 = vmatpush2.bf16.msra.mxu0 0
        %1853 = vmatprep.subr.bf16.mxu0 0
        %1854 = vmatpush2.bf16.msra.mxu0 0
        %1855 = vmatprep.mubr.bf16.mxu0 0
        %1856 = vmatmul.mubr.bf16.gmra.mxu0 %v1821
        %v1857 = vpop.f32.mrf.mxu0
        %v1858 = vadd.f32 %v1806, %v1857
        %v1859 = vpop.f32.mrf.mxu0
        %v1860 = vpop.f32.mrf.mxu0
        %v1861 = vadd.f32 %v1806, %v1860
        %v1862 = vpop.f32.mrf.mxu0
        %1863 = vdwg.mxu0
        %v1864 = vmul.f32 %v1858, 0.5
        %v1865 = vmul.f32 %v1861, 0.5
        %v1866 = vmul.f32 %v1858, 0.044715
        %v1867 = vmul.f32 %v1861, 0.044715
        %v1868 = vmul.f32 %v1866, %v1858
        %v1869 = vmul.f32 %v1867, %v1861
        %v1870 = vmul.f32 %v1868, %v1858
        %v1871 = vmul.f32 %v1869, %v1861
        %v1872 = vadd.f32 %v1858, %v1870
        %v1873 = vadd.f32 %v1861, %v1871
        %v1874 = vmul.f32 %v1872, 0.7978846
        %v1875 = vmul.f32 %v1873, 0.7978846
        %v1876 = vtanh.pop %v1874
        %v1877 = vtanh.pop %v1875
        %v1878 = vadd.f32 %v1876, 1.0
        %v1879 = vadd.f32 %v1877, 1.0
        %v1880 = vmul.f32 %v1864, %v1878
        %v1881 = vmul.f32 %v1865, %v1879
        %v1882 = vpack.c.bf16 %v1881, %v1880
        %v1883 = vld [vmem:[%s1002] sm:$0xf]
        %v1884 = vld [vmem:[%s1002 + $0x4] sm:$0xf]
        %v1885 = vld [vmem:[%s1002 + $0x8] sm:$0xf]
        %v1886 = vld [vmem:[%s1002 + $0xc] sm:$0xf]
        %v1887 = vld [vmem:[%s1002 + $0x10] sm:$0xf]
        %v1888 = vld [vmem:[%s1002 + $0x14] sm:$0xf]
        %v1889 = vld [vmem:[%s1002 + $0x18] sm:$0xf]
        %v1890 = vld [vmem:[%s1002 + $0x1c] sm:$0xf]
        %v1891 = vld [vmem:[%s866] sm:$0x1]
        %v1893 = vlaneseq
        %v1894 = vshrl.u32 %v1893, 7
        %v1895 = vsub.s32 0, %v1894
        %v1896 = vrot.slane %v1891, %v1895
        %v1906 = vunpack.c.l.b16 %v1883
        %v1907 = vunpack.c.l.b16 %v1884
        %v1908 = vunpack.c.l.b16 %v1885
        %v1909 = vunpack.c.l.b16 %v1886
        %v1910 = vunpack.c.l.b16 %v1887
        %v1911 = vunpack.c.l.b16 %v1888
        %v1912 = vunpack.c.l.b16 %v1889
        %v1913 = vunpack.c.l.b16 %v1890
        %v1914 = vpack.c.b16 %v1907, %v1906
        %v1915 = vpack.c.b16 %v1909, %v1908
        %v1916 = vpack.c.b16 %v1911, %v1910
        %v1917 = vpack.c.b16 %v1913, %v1912
        %vm1922 = vcmask 523264
        %v1924 = vsel %vm1922, %v1882, 0
        %1926 = vmatprep.subr.bf16.mxu0 0
        %1927 = vmatpush1.bf16.msra.mxu0 0
        %1928 = vmatprep.subr.bf16.mxu0 0
        %1929 = vmatpush1.bf16.msra.mxu0 0
        %1930 = vmatprep.subr.bf16.mxu0 0
        %1931 = vmatpush1.bf16.msra.mxu0 0
        %1932 = vmatprep.subr.bf16.mxu0 0
        %1933 = vmatpush1.bf16.msra.mxu0 0
        %1934 = vmatprep.subr.bf16.mxu0 0
        %1935 = vmatpush1.bf16.msra.mxu0 %v1917
        %1936 = vmatprep.subr.bf16.mxu0 0
        %1937 = vmatpush1.bf16.msra.mxu0 %v1916
        %1938 = vmatprep.subr.bf16.mxu0 0
        %1939 = vmatpush1.bf16.msra.mxu0 %v1915
        %1940 = vmatprep.subr.bf16.mxu0 0
        %1941 = vmatpush1.bf16.msra.mxu0 %v1914
        %1942 = vmatprep.subr.bf16.mxu0 0
        %1943 = vmatpush2.bf16.msra.mxu0 0
        %1944 = vmatprep.subr.bf16.mxu0 0
        %1945 = vmatpush2.bf16.msra.mxu0 0
        %1946 = vmatprep.subr.bf16.mxu0 0
        %1947 = vmatpush2.bf16.msra.mxu0 0
        %1948 = vmatprep.subr.bf16.mxu0 0
        %1949 = vmatpush2.bf16.msra.mxu0 0
        %1950 = vmatprep.subr.bf16.mxu0 0
        %1951 = vmatpush2.bf16.msra.mxu0 0
        %1952 = vmatprep.subr.bf16.mxu0 0
        %1953 = vmatpush2.bf16.msra.mxu0 0
        %1954 = vmatprep.subr.bf16.mxu0 0
        %1955 = vmatpush2.bf16.msra.mxu0 0
        %1956 = vmatprep.subr.bf16.mxu0 0
        %1957 = vmatpush2.bf16.msra.mxu0 0
        %1958 = vmatprep.mubr.bf16.mxu0 0
        %1959 = vmatmul.mubr.bf16.gmra.mxu0 %v1924
        %v1960 = vpop.f32.mrf.mxu0
        %v1961 = vadd.f32 %v1896, %v1960
        %v1962 = vpop.f32.mrf.mxu0
        %v1963 = vpop.f32.mrf.mxu0
        %v1964 = vadd.f32 %v1896, %v1963
        %v1965 = vpop.f32.mrf.mxu0
        %1966 = vdwg.mxu0
        %v1967 = vadd.f32 %v1794, %v1961
        %v1968 = vadd.f32 %v1795, %v1964
        %v1969 = vld [vmem:[%s874] sm:$0x1]
        %v1970 = vld [vmem:[%s882] sm:$0x1]
        %v1971 = vsel %vm1105, %v1967, 0.0
        %1972 = vadd.xlane.f32.xlu0 %v1971
        %v1973 = vpop.xlane.xlu0 %1972
        %v1974 = vsel %vm1105, %v1968, 0.0
        %1975 = vadd.xlane.f32.xlu0 %v1974
        %v1976 = vpop.xlane.xlu0 %1975
        %v1977 = vmul.f32 %v1973, %v1759
        %v1978 = vmul.f32 %v1976, %v1759
        %v1979 = vsub.f32 %v1967, %v1977
        %v1980 = vsub.f32 %v1968, %v1978
        %v1981 = vmul.f32 %v1979, %v1979
        %v1982 = vmul.f32 %v1980, %v1980
        %v1983 = vsel %vm1105, %v1981, 0.0
        %1984 = vadd.xlane.f32.xlu0 %v1983
        %v1985 = vpop.xlane.xlu0 %1984
        %v1986 = vsel %vm1105, %v1982, 0.0
        %1987 = vadd.xlane.f32.xlu0 %v1986
        %v1988 = vpop.xlane.xlu0 %1987
        %v1989 = vmul.f32 %v1985, %v1759
        %v1990 = vmul.f32 %v1988, %v1759
        %v1991 = vadd.f32 %v1989, 1e-05
        %v1992 = vadd.f32 %v1990, 1e-05
        %v1993 = vrsqrt.pop %v1991
        %v1994 = vrsqrt.pop %v1992
        %v1995 = vmul.f32 %v1979, %v1993
        %v1996 = vmul.f32 %v1980, %v1994
        %v1998 = vlaneseq
        %v1999 = vshrl.u32 %v1998, 7
        %v2000 = vsub.s32 0, %v1999
        %v2001 = vrot.slane %v1969, %v2000
        %v2003 = vmul.f32 %v1995, %v2001
        %v2004 = vmul.f32 %v1996, %v2001
        %v2006 = vlaneseq
        %v2007 = vshrl.u32 %v2006, 7
        %v2008 = vsub.s32 0, %v2007
        %v2009 = vrot.slane %v1970, %v2008
        %v2011 = vadd.f32 %v2003, %v2009
        %v2012 = vadd.f32 %v2004, %v2009
        %2013 = vst.msk [vmem:[#allocation2] sm:$0xff] %vm1105, %v2011
        %2014 = vst.msk [vmem:[#allocation2 + $0x8] sm:$0xff] %vm1105, %v2012
        %p2015 = scmp.eq.s32.totalorder %s38, 1
        // Predicated region
        $region153: #{tpu_custom_call.1} parent=99 // pred_check
          %p2016 = pneg %p2015
        $region154: #{tpu_custom_call.1} parent=99 // pred_check_branch
          %2018 = sbr.rel (%p2016) target = $region156
        $region155: #{tpu_custom_call.1} parent=99 // pred_region
          %v2019 = vld [vmem:[#allocation2] ss:$8 sm:$0x3]
          %v2020 = vpack.c.bf16 %v2019, %v2019
          %v2021 = vld [vmem:[%s17] sm:$0xf]
          %v2022 = vld [vmem:[%s17 + $0x4] sm:$0xf]
          %v2023 = vld [vmem:[%s17 + $0x8] sm:$0xf]
          %v2024 = vld [vmem:[%s17 + $0xc] sm:$0xf]
          %v2025 = vld [vmem:[%s18] sm:$0x1]
          %v2027 = vlaneseq
          %v2028 = vshrl.u32 %v2027, 7
          %v2029 = vsub.s32 0, %v2028
          %v2030 = vrot.slane %v2025, %v2029
          %v2036 = vunpack.c.l.b16 %v2021
          %v2037 = vunpack.c.l.b16 %v2022
          %v2038 = vunpack.c.l.b16 %v2023
          %v2039 = vunpack.c.l.b16 %v2024
          %v2040 = vpack.c.b16 %v2037, %v2036
          %v2041 = vpack.c.b16 %v2039, %v2038
          %v2045 = vsel %vm1105, %v2020, 0
          %2047 = vmatprep.subr.bf16.mxu0 0
          %2048 = vmatpush1.bf16.msra.mxu0 0
          %2049 = vmatprep.subr.bf16.mxu0 0
          %2050 = vmatpush1.bf16.msra.mxu0 0
          %2051 = vmatprep.subr.bf16.mxu0 0
          %2052 = vmatpush1.bf16.msra.mxu0 0
          %2053 = vmatprep.subr.bf16.mxu0 0
          %2054 = vmatpush1.bf16.msra.mxu0 0
          %2055 = vmatprep.subr.bf16.mxu0 0
          %2056 = vmatpush1.bf16.msra.mxu0 0
          %2057 = vmatprep.subr.bf16.mxu0 0
          %2058 = vmatpush1.bf16.msra.mxu0 0
          %2059 = vmatprep.subr.bf16.mxu0 0
          %2060 = vmatpush1.bf16.msra.mxu0 %v2041
          %2061 = vmatprep.subr.bf16.mxu0 0
          %2062 = vmatpush1.bf16.msra.mxu0 %v2040
          %2063 = vmatprep.subr.bf16.mxu0 0
          %2064 = vmatpush2.bf16.msra.mxu0 0
          %2065 = vmatprep.subr.bf16.mxu0 0
          %2066 = vmatpush2.bf16.msra.mxu0 0
          %2067 = vmatprep.subr.bf16.mxu0 0
          %2068 = vmatpush2.bf16.msra.mxu0 0
          %2069 = vmatprep.subr.bf16.mxu0 0
          %2070 = vmatpush2.bf16.msra.mxu0 0
          %2071 = vmatprep.subr.bf16.mxu0 0
          %2072 = vmatpush2.bf16.msra.mxu0 0
          %2073 = vmatprep.subr.bf16.mxu0 0
          %2074 = vmatpush2.bf16.msra.mxu0 0
          %2075 = vmatprep.subr.bf16.mxu0 0
          %2076 = vmatpush2.bf16.msra.mxu0 0
          %2077 = vmatprep.subr.bf16.mxu0 0
          %2078 = vmatpush2.bf16.msra.mxu0 0
          %2079 = vmatprep.mubr.bf16.mxu0 0
          %2080 = vmatmul.mubr.bf16.gmra.mxu0 %v2045
          %v2081 = vpop.f32.mrf.mxu0
          %v2082 = vadd.f32 %v2030, %v2081
          %v2083 = vpop.f32.mrf.mxu0
          %v2084 = vpop.f32.mrf.mxu0
          %v2085 = vpop.f32.mrf.mxu0
          %2086 = vdwg.mxu0
          %2087 = vst [vmem:[#allocation20] sm:$0x3] %v2082
          %vm2088 = vcmask 1041408
          %v2089 = vsel %vm2088, %v2082, -inf
          %2090 = vmax.xlane.f32.xlu0 %v2089
          %v2091 = vpop.xlane.xlu0 %2090
          %v2092 = vsub.f32 %v2082, %v2091
          %v2093 = vmul.f32 %v2092, 1.442695
          %v2094 = vpow.pop %v2093
          %v2095 = vsel %vm2088, %v2094, 0.0
          %2096 = vadd.xlane.f32.xlu0 %v2095
          %v2097 = vpop.xlane.xlu0 %2096
          %v2098 = vlog2.pop %v2097
          %v2099 = vmul.f32 %v2098, 0.6931472
          %v2100 = vadd.f32 %v2099, %v2091
          %v2101 = vld [vmem:[%s19] sm:$0x3]
          %v2102 = vsub.f32 %v2082, %v2100
          %v2103 = vmul.f32 %v2101, %v2102
          %v2104 = vsel %vm2088, %v2103, 0.0
          %2105 = vadd.xlane.f32.xlu0 %v2104
          %v2106 = vpop.xlane.xlu0 %2105
          %v2107 = vsub.f32 0.0, %v2106
          %v2108 = vsel %vm2088, %v2107, 0.0
          %v2109 = vrot.slane %v2108, 4
          %v2110 = vadd.f32 %v2108, %v2109
          %v2111 = vrot.slane %v2110, 2
          %v2112 = vadd.f32 %v2110, %v2111
          %v2113 = vrot.slane %v2112, 1
          %v2114 = vadd.f32 %v2112, %v2113
          %v2115 = vmul.f32 %v2114, 0.5
          %vm2116 = vcmask 0
          %2117 = vst.msk [vmem:[#allocation21] sm:$0x1] %vm2116, %v2115
        $region156: #{tpu_custom_call.1} parent=99 // pred_fallthru
          _
        // Predicated region
        $region157: #{tpu_custom_call.1} parent=99 // pred_check
          %p2118 = pneg %p531
        $region158: #{tpu_custom_call.1} parent=99 // pred_check_branch
          %2120 = sbr.rel (%p2118) target = $region160
        $region159: #{tpu_custom_call.1} parent=99 // pred_region
          %s2122 = ssub.s32 32, 32
          %2123 = vsyncadd [#allocation6], %s2122
          %s2125 = sshll.u32 [#allocation20], 4
          %s2126 = int_to_ptr.vmem [resolvable:$true] %s2125
          %2128 = dma.vmem_to_hbm [thread:$0]  %s2126, 32, %s20, [#allocation6]
        $region160: #{tpu_custom_call.1} parent=99 // pred_fallthru
          _
        // Predicated region
        $region161: #{tpu_custom_call.1} parent=99 // pred_check
          %p2129 = pneg %p552
        $region162: #{tpu_custom_call.1} parent=99 // pred_check_branch
          %2131 = sbr.rel (%p2129) target = $region164
        $region163: #{tpu_custom_call.1} parent=99 // pred_region
          %s2133 = ssub.s32 16, 16
          %2134 = vsyncadd [#allocation22], %s2133
          %s2136 = sshll.u32 [#allocation21], 4
          %s2137 = int_to_ptr.vmem [resolvable:$true] %s2136
          %2139 = dma.vmem_to_hbm [thread:$0]  %s2137, 16, %s21, [#allocation22]
        $region164: #{tpu_custom_call.1} parent=99 // pred_fallthru
          _
        // Predicated region
        $region165: #{tpu_custom_call.1} parent=99 // pred_check
          %p2140 = pneg %p531
        $region166: #{tpu_custom_call.1} parent=99 // pred_check_branch
          %2142 = sbr.rel (%p2140) target = $region168
        $region167: #{tpu_custom_call.1} parent=99 // pred_region
          %2143 = dma.done [#allocation6], 32
        $region168: #{tpu_custom_call.1} parent=99 // pred_fallthru
          _
        // Predicated region
        $region169: #{tpu_custom_call.1} parent=99 // pred_check
          %p2144 = pneg %p552
        $region170: #{tpu_custom_call.1} parent=99 // pred_check_branch
          %2146 = sbr.rel (%p2144) target = $region172
        $region171: #{tpu_custom_call.1} parent=99 // pred_region
          %2147 = dma.done [#allocation22], 16
        $region172: #{tpu_custom_call.1} parent=99 // pred_fallthru
          _
      $region100: #{tpu_custom_call.1} parent=5 // pred_fallthru
        _
      %p2148 = scmp.le.s32.totalorder 2, %s33
      // Predicated region
      $region173: #{tpu_custom_call.1} parent=5 // pred_check
        %p2149 = pneg %p2148
      $region174: #{tpu_custom_call.1} parent=5 // pred_check_branch
        %2151 = sbr.rel (%p2149) target = $region176
      $region175: #{tpu_custom_call.1} parent=5 // pred_region
        %s2152 = ssub.s32 %s33, 2
      $region176: #{tpu_custom_call.1} parent=5 // pred_fallthru
        _
    $region6: #{tpu_custom_call.1} parent=1 // loop_footer
      %s37 = sadd.s32 1, %s33
    $region7: #{tpu_custom_call.1} parent=1 // loop_footer_branch
      %32 = sbr.rel target = $region3
    $region8: #{tpu_custom_call.1} parent=1 // loop_exit
      _
    %2153 = vsyncpa [#allocation5], 1
    %s2154 = scalar_lea.sflag [#allocation5], 1
    %2155 = vsyncpa %s2154, 1
    %2156 = vsyncpa [#allocation8], 1
    %2157 = vsyncpa [#allocation11], 1
    %2158 = vsyncpa [#allocation6], 1
    %s2159 = scalar_lea.sflag [#allocation6], 1
    %2160 = vsyncpa %s2159, 1
    %2161 = vsyncpa [#allocation22], 1

</llo_original>
